<compile_context>
chip_gen: v6e
topology: v6e:2x2x1
jax: 0.10.0
libtpu: 0.0.40
codegen_flags: <defaults>
</compile_context>

<pallas_src>
import jax
import jax.numpy as jnp
from jax import lax
from jax.experimental import pallas as pl
from jax.experimental.pallas import tpu as pltpu

D_MODEL = 768
MAXLEN = 10
N_SEGMENTS = 2
VOCAB_SIZE = 1000
LN_EPS = 1e-5


def _make_kernel(seq_len, num_tiles, tile_rows, nbuf):
    T = tile_rows

    def kernel(ids_ref,            # SMEM (n_pad,) int32   -- scalar prefetch (token ids)
               tok_hbm,            # HBM  (VOCAB, D)       -- memory_space=pl.ANY
               pos_tab_ref,        # VMEM (MAXLEN, D)      -- resident
               seg_tab_ref,        # VMEM (N_SEGMENTS, D)  -- resident
               gamma_ref,          # VMEM (1, D)
               beta_ref,           # VMEM (1, D)
               seg_ids_ref,        # VMEM (T, 1) int32
               out_ref,            # VMEM (T, D) output tile
               tok_buf,            # VMEM (nbuf, T, D) gather ring buffer
               copy_sem):          # DMA semaphores (nbuf, T)
        step = pl.program_id(0)

        def start_fetch(s, slot):
            # Issue T row-gather DMAs for tile `s` into ring-buffer slot `slot`.
            base = s * T
            for t in range(T):
                pltpu.make_async_copy(
                    tok_hbm.at[pl.ds(ids_ref[base + t], 1), :],
                    tok_buf.at[slot, pl.ds(t, 1), :],
                    copy_sem.at[slot, t],
                ).start()

        # Prime the gather pipeline (tiles 0 .. nbuf-2) on the first step.
        @pl.when(step == 0)
        def _():
            for j in range(min(nbuf - 1, num_tiles)):
                start_fetch(j, j)

        # Keep the pipeline `nbuf` tiles deep.
        lookahead = step + (nbuf - 1)

        @pl.when(lookahead < num_tiles)
        def _():
            start_fetch(lookahead, lookahead % nbuf)

        # Wait for this tile's token rows.
        slot = step % nbuf
        for t in range(T):
            pltpu.make_async_copy(
                tok_hbm.at[pl.ds(0, 1), :],          # shape proxy for the wait
                tok_buf.at[slot, pl.ds(t, 1), :],
                copy_sem.at[slot, t],
            ).wait()

        tok = tok_buf[slot]                           # (T, D) gathered token rows

        # Position ids for this tile: global row index mod seq_len.
        row0 = step * T
        pos_ids = (row0 + lax.broadcasted_iota(jnp.int32, (T, 1), 0)) % seq_len

        # Positional embedding: select rows of the VMEM-resident table (<= 10 rows).
        pos_emb = jnp.zeros((T, D_MODEL), dtype=jnp.float32)
        for r in range(seq_len):
            pos_emb = jnp.where(pos_ids == r, pos_tab_ref[r:r + 1, :], pos_emb)

        # Segment embedding: only two rows -> a single broadcast select.
        seg_ids = seg_ids_ref[...]                    # (T, 1) int32
        seg_emb = jnp.where(seg_ids == 0, seg_tab_ref[0:1, :], seg_tab_ref[1:2, :])

        e = tok + pos_emb + seg_emb                   # (T, D) float32

        # LayerNorm over d_model (biased variance, eps = 1e-5), then affine.
        mean = jnp.mean(e, axis=-1, keepdims=True)
        c = e - mean
        var = jnp.mean(c * c, axis=-1, keepdims=True)
        inv = lax.rsqrt(var + LN_EPS)
        out_ref[...] = c * inv * gamma_ref[...] + beta_ref[...]

    return kernel


def bert_embedding(x, seg, tok_table, pos_table, seg_table, gamma, beta,
                   *, tile_rows=None, nbuf=4):
    B, S = x.shape
    assert S <= MAXLEN
    n = B * S
    if tile_rows is None:
        tile_rows = 32 if n >= 256 else 8   # T rows per grid step (multiple of 8)
    T = tile_rows
    num_tiles = pl.cdiv(n, T)
    n_pad = num_tiles * T
    pad = n_pad - n

    ids_flat = x.reshape(n).astype(jnp.int32)
    seg_flat = seg.reshape(n).astype(jnp.int32)
    if pad:
        ids_flat = jnp.concatenate([ids_flat, jnp.zeros((pad,), jnp.int32)])
        seg_flat = jnp.concatenate([seg_flat, jnp.zeros((pad,), jnp.int32)])
    seg_col = seg_flat.reshape(n_pad, 1)

    gamma2 = gamma.reshape(1, D_MODEL).astype(jnp.float32)
    beta2 = beta.reshape(1, D_MODEL).astype(jnp.float32)

    kernel = _make_kernel(S, num_tiles, T, nbuf)

    grid_spec = pltpu.PrefetchScalarGridSpec(
        num_scalar_prefetch=1,          # token ids -> SMEM, used as DMA gather addresses
        grid=(num_tiles,),
        in_specs=[
            pl.BlockSpec(memory_space=pl.ANY),                            # tok table stays in HBM
            pl.BlockSpec((MAXLEN, D_MODEL), lambda i, ids: (0, 0)),       # pos table, VMEM resident
            pl.BlockSpec((N_SEGMENTS, D_MODEL), lambda i, ids: (0, 0)),   # seg table, VMEM resident
            pl.BlockSpec((1, D_MODEL), lambda i, ids: (0, 0)),            # gamma
            pl.BlockSpec((1, D_MODEL), lambda i, ids: (0, 0)),            # beta
            pl.BlockSpec((T, 1), lambda i, ids: (i, 0)),                  # segment ids per tile
        ],
        out_specs=pl.BlockSpec((T, D_MODEL), lambda i, ids: (i, 0)),
        scratch_shapes=[
            pltpu.VMEM((nbuf, T, D_MODEL), jnp.float32),
            pltpu.SemaphoreType.DMA((nbuf, T)),
        ],
    )

    out_flat = pl.pallas_call(
        kernel,
        out_shape=jax.ShapeDtypeStruct((n_pad, D_MODEL), jnp.float32),
        grid_spec=grid_spec,
        compiler_params=pltpu.CompilerParams(
            # Sequential semantics required: the prefetch ring carries state
            # across grid iterations.  (For v7x dual-core, split an outer
            # "parallel" axis over super-tiles instead.)
            dimension_semantics=("arbitrary",),
        ),
    )(ids_flat,
      tok_table.astype(jnp.float32),
      pos_table.astype(jnp.float32),
      seg_table.astype(jnp.float32),
      gamma2, beta2, seg_col)

    return out_flat[:n].reshape(B, S, D_MODEL)


def _reference(x, seg, tok_table, pos_table, seg_table, gamma, beta):
    B, S = x.shape
    pos = jnp.arange(S, dtype=jnp.int32)[None, :].repeat(B, axis=0)
    e = tok_table[x] + pos_table[pos] + seg_table[seg]
    mean = jnp.mean(e, axis=-1, keepdims=True)
    var = jnp.mean((e - mean) ** 2, axis=-1, keepdims=True)
    return (e - mean) * lax.rsqrt(var + LN_EPS) * gamma + beta


if __name__ == "__main__":
    key = jax.random.PRNGKey(0)
    k_tok, k_pos, k_seg, k_x, k_s = jax.random.split(key, 5)

    B, S = 2, 8   # S <= maxlen (10); n = 16 -> 2 grid tiles of 8 rows

    # deterministic parameter init (nn.Embedding ~ N(0,1); LayerNorm gamma=1, beta=0)
    tok_table = jax.random.normal(k_tok, (VOCAB_SIZE, D_MODEL), dtype=jnp.float32)
    pos_table = jax.random.normal(k_pos, (MAXLEN, D_MODEL), dtype=jnp.float32)
    seg_table = jax.random.normal(k_seg, (N_SEGMENTS, D_MODEL), dtype=jnp.float32)
    gamma = jnp.ones((D_MODEL,), dtype=jnp.float32)
    beta = jnp.zeros((D_MODEL,), dtype=jnp.float32)

    x = jax.random.randint(k_x, (B, S), 0, VOCAB_SIZE, dtype=jnp.int32)
    seg = jax.random.randint(k_s, (B, S), 0, N_SEGMENTS, dtype=jnp.int32)

    out = bert_embedding(x, seg, tok_table, pos_table, seg_table, gamma, beta)
    out = jax.block_until_ready(out)

    ref = _reference(x, seg, tok_table, pos_table, seg_table, gamma, beta)
    assert out.shape == (B, S, D_MODEL)
    assert jnp.allclose(out, ref, atol=1e-4, rtol=1e-4)

    print("KERNEL_OK")
</pallas_src>

<mosaic_0001>
module attributes {stable_mosaic.version = 11 : i64} {
  func.func @kernel(%arg0: i32, %arg1: memref<16xi32, #tpu.memory_space<smem>>, %arg2: memref<1000x768xf32, #tpu.memory_space<any>>, %arg3: memref<10x768xf32, #tpu.memory_space<vmem>>, %arg4: memref<2x768xf32, #tpu.memory_space<vmem>>, %arg5: memref<1x768xf32, #tpu.memory_space<vmem>>, %arg6: memref<1x768xf32, #tpu.memory_space<vmem>>, %arg7: memref<8x1xi32, #tpu.memory_space<vmem>>, %arg8: memref<8x768xf32, #tpu.memory_space<vmem>>, %arg9: memref<4x8x768xf32, #tpu.memory_space<vmem>>, %arg10: memref<4x8x!tpu.dma_semaphore, #tpu.memory_space<semaphore_mem>>) attributes {dimension_semantics = [#tpu.dimension_semantics<arbitrary>], iteration_bounds = array<i64: 2>, scalar_prefetch = 1 : i64, scratch_operands = 2 : i64, tpu.core_type = #tpu.core_type<tc>, window_params = [{}, {pipeline_mode = #tpu.pipeline_mode<synchronous>, transform_indices = @transform_1, window_bounds = array<i64: 10, 768>}, {pipeline_mode = #tpu.pipeline_mode<synchronous>, transform_indices = @transform_2, window_bounds = array<i64: 2, 768>}, {pipeline_mode = #tpu.pipeline_mode<synchronous>, transform_indices = @transform_3, window_bounds = array<i64: 1, 768>}, {pipeline_mode = #tpu.pipeline_mode<synchronous>, transform_indices = @transform_4, window_bounds = array<i64: 1, 768>}, {transform_indices = @transform_5, window_bounds = array<i64: 8, 1>}, {transform_indices = @transform_6, window_bounds = array<i64: 8, 768>}]} {
    %c0_i32 = arith.constant 0 : i32
    %0 = arith.cmpi eq, %arg0, %c0_i32 : i32
    %1 = arith.extui %0 : i1 to i32
    %c0_i32_0 = arith.constant 0 : i32
    %2 = arith.cmpi ne, %1, %c0_i32_0 : i32
    scf.if %2 {
      %c0_85 = arith.constant 0 : index
      %182 = memref.load %arg1[%c0_85] : memref<16xi32, #tpu.memory_space<smem>>
      %c0_i32_86 = arith.constant 0 : i32
      %c0_i32_87 = arith.constant 0 : i32
      %c0_i32_88 = arith.constant 0 : i32
      %c0_i32_89 = arith.constant 0 : i32
      %183 = tpu.memref_slice %arg2[%182, %c0_i32_89] : memref<1000x768xf32, #tpu.memory_space<any>> -> memref<1x768xf32, #tpu.memory_space<any>>
      %c0_i32_90 = arith.constant 0 : i32
      %c0_i32_91 = arith.constant 0 : i32
      %184 = tpu.memref_slice %arg9[%c0_i32_86, %c0_i32_90, %c0_i32_91] : memref<4x8x768xf32, #tpu.memory_space<vmem>> -> memref<1x1x768xf32, #tpu.memory_space<vmem>>
      %185 = tpu.memref_squeeze %184 : memref<1x1x768xf32, #tpu.memory_space<vmem>> -> memref<1x768xf32, #tpu.memory_space<vmem>>
      %186 = tpu.memref_slice %arg10[%c0_i32_87, %c0_i32_88] : memref<4x8x!tpu.dma_semaphore, #tpu.memory_space<semaphore_mem>> -> memref<1x1x!tpu.dma_semaphore, #tpu.memory_space<semaphore_mem>>
      %187 = tpu.memref_squeeze %186 : memref<1x1x!tpu.dma_semaphore, #tpu.memory_space<semaphore_mem>> -> memref<!tpu.dma_semaphore, #tpu.memory_space<semaphore_mem>>
      tpu.enqueue_dma source(%183 : memref<1x768xf32, #tpu.memory_space<any>>) target(%185 : memref<1x768xf32, #tpu.memory_space<vmem>>) target_semaphore(%187 : memref<!tpu.dma_semaphore, #tpu.memory_space<semaphore_mem>>)
      %c1_92 = arith.constant 1 : index
      %188 = memref.load %arg1[%c1_92] : memref<16xi32, #tpu.memory_space<smem>>
      %c0_i32_93 = arith.constant 0 : i32
      %c0_i32_94 = arith.constant 0 : i32
      %c1_i32_95 = arith.constant 1 : i32
      %c0_i32_96 = arith.constant 0 : i32
      %189 = tpu.memref_slice %arg2[%188, %c0_i32_96] : memref<1000x768xf32, #tpu.memory_space<any>> -> memref<1x768xf32, #tpu.memory_space<any>>
      %c1_i32_97 = arith.constant 1 : i32
      %c0_i32_98 = arith.constant 0 : i32
      %190 = tpu.memref_slice %arg9[%c0_i32_93, %c1_i32_97, %c0_i32_98] : memref<4x8x768xf32, #tpu.memory_space<vmem>> -> memref<1x1x768xf32, #tpu.memory_space<vmem>>
      %191 = tpu.memref_squeeze %190 : memref<1x1x768xf32, #tpu.memory_space<vmem>> -> memref<1x768xf32, #tpu.memory_space<vmem>>
      %192 = tpu.memref_slice %arg10[%c0_i32_94, %c1_i32_95] : memref<4x8x!tpu.dma_semaphore, #tpu.memory_space<semaphore_mem>> -> memref<1x1x!tpu.dma_semaphore, #tpu.memory_space<semaphore_mem>>
      %193 = tpu.memref_squeeze %192 : memref<1x1x!tpu.dma_semaphore, #tpu.memory_space<semaphore_mem>> -> memref<!tpu.dma_semaphore, #tpu.memory_space<semaphore_mem>>
      tpu.enqueue_dma source(%189 : memref<1x768xf32, #tpu.memory_space<any>>) target(%191 : memref<1x768xf32, #tpu.memory_space<vmem>>) target_semaphore(%193 : memref<!tpu.dma_semaphore, #tpu.memory_space<semaphore_mem>>)
      %c2_99 = arith.constant 2 : index
      %194 = memref.load %arg1[%c2_99] : memref<16xi32, #tpu.memory_space<smem>>
      %c0_i32_100 = arith.constant 0 : i32
      %c0_i32_101 = arith.constant 0 : i32
      %c2_i32_102 = arith.constant 2 : i32
      %c0_i32_103 = arith.constant 0 : i32
      %195 = tpu.memref_slice %arg2[%194, %c0_i32_103] : memref<1000x768xf32, #tpu.memory_space<any>> -> memref<1x768xf32, #tpu.memory_space<any>>
      %c2_i32_104 = arith.constant 2 : i32
      %c0_i32_105 = arith.constant 0 : i32
      %196 = tpu.memref_slice %arg9[%c0_i32_100, %c2_i32_104, %c0_i32_105] : memref<4x8x768xf32, #tpu.memory_space<vmem>> -> memref<1x1x768xf32, #tpu.memory_space<vmem>>
      %197 = tpu.memref_squeeze %196 : memref<1x1x768xf32, #tpu.memory_space<vmem>> -> memref<1x768xf32, #tpu.memory_space<vmem>>
      %198 = tpu.memref_slice %arg10[%c0_i32_101, %c2_i32_102] : memref<4x8x!tpu.dma_semaphore, #tpu.memory_space<semaphore_mem>> -> memref<1x1x!tpu.dma_semaphore, #tpu.memory_space<semaphore_mem>>
      %199 = tpu.memref_squeeze %198 : memref<1x1x!tpu.dma_semaphore, #tpu.memory_space<semaphore_mem>> -> memref<!tpu.dma_semaphore, #tpu.memory_space<semaphore_mem>>
      tpu.enqueue_dma source(%195 : memref<1x768xf32, #tpu.memory_space<any>>) target(%197 : memref<1x768xf32, #tpu.memory_space<vmem>>) target_semaphore(%199 : memref<!tpu.dma_semaphore, #tpu.memory_space<semaphore_mem>>)
      %c3_106 = arith.constant 3 : index
      %200 = memref.load %arg1[%c3_106] : memref<16xi32, #tpu.memory_space<smem>>
      %c0_i32_107 = arith.constant 0 : i32
      %c0_i32_108 = arith.constant 0 : i32
      %c3_i32_109 = arith.constant 3 : i32
      %c0_i32_110 = arith.constant 0 : i32
      %201 = tpu.memref_slice %arg2[%200, %c0_i32_110] : memref<1000x768xf32, #tpu.memory_space<any>> -> memref<1x768xf32, #tpu.memory_space<any>>
      %c3_i32_111 = arith.constant 3 : i32
      %c0_i32_112 = arith.constant 0 : i32
      %202 = tpu.memref_slice %arg9[%c0_i32_107, %c3_i32_111, %c0_i32_112] : memref<4x8x768xf32, #tpu.memory_space<vmem>> -> memref<1x1x768xf32, #tpu.memory_space<vmem>>
      %203 = tpu.memref_squeeze %202 : memref<1x1x768xf32, #tpu.memory_space<vmem>> -> memref<1x768xf32, #tpu.memory_space<vmem>>
      %204 = tpu.memref_slice %arg10[%c0_i32_108, %c3_i32_109] : memref<4x8x!tpu.dma_semaphore, #tpu.memory_space<semaphore_mem>> -> memref<1x1x!tpu.dma_semaphore, #tpu.memory_space<semaphore_mem>>
      %205 = tpu.memref_squeeze %204 : memref<1x1x!tpu.dma_semaphore, #tpu.memory_space<semaphore_mem>> -> memref<!tpu.dma_semaphore, #tpu.memory_space<semaphore_mem>>
      tpu.enqueue_dma source(%201 : memref<1x768xf32, #tpu.memory_space<any>>) target(%203 : memref<1x768xf32, #tpu.memory_space<vmem>>) target_semaphore(%205 : memref<!tpu.dma_semaphore, #tpu.memory_space<semaphore_mem>>)
      %c4_113 = arith.constant 4 : index
      %206 = memref.load %arg1[%c4_113] : memref<16xi32, #tpu.memory_space<smem>>
      %c0_i32_114 = arith.constant 0 : i32
      %c0_i32_115 = arith.constant 0 : i32
      %c4_i32_116 = arith.constant 4 : i32
      %c0_i32_117 = arith.constant 0 : i32
      %207 = tpu.memref_slice %arg2[%206, %c0_i32_117] : memref<1000x768xf32, #tpu.memory_space<any>> -> memref<1x768xf32, #tpu.memory_space<any>>
      %c4_i32_118 = arith.constant 4 : i32
      %c0_i32_119 = arith.constant 0 : i32
      %208 = tpu.memref_slice %arg9[%c0_i32_114, %c4_i32_118, %c0_i32_119] : memref<4x8x768xf32, #tpu.memory_space<vmem>> -> memref<1x1x768xf32, #tpu.memory_space<vmem>>
      %209 = tpu.memref_squeeze %208 : memref<1x1x768xf32, #tpu.memory_space<vmem>> -> memref<1x768xf32, #tpu.memory_space<vmem>>
      %210 = tpu.memref_slice %arg10[%c0_i32_115, %c4_i32_116] : memref<4x8x!tpu.dma_semaphore, #tpu.memory_space<semaphore_mem>> -> memref<1x1x!tpu.dma_semaphore, #tpu.memory_space<semaphore_mem>>
      %211 = tpu.memref_squeeze %210 : memref<1x1x!tpu.dma_semaphore, #tpu.memory_space<semaphore_mem>> -> memref<!tpu.dma_semaphore, #tpu.memory_space<semaphore_mem>>
      tpu.enqueue_dma source(%207 : memref<1x768xf32, #tpu.memory_space<any>>) target(%209 : memref<1x768xf32, #tpu.memory_space<vmem>>) target_semaphore(%211 : memref<!tpu.dma_semaphore, #tpu.memory_space<semaphore_mem>>)
      %c5_120 = arith.constant 5 : index
      %212 = memref.load %arg1[%c5_120] : memref<16xi32, #tpu.memory_space<smem>>
      %c0_i32_121 = arith.constant 0 : i32
      %c0_i32_122 = arith.constant 0 : i32
      %c5_i32_123 = arith.constant 5 : i32
      %c0_i32_124 = arith.constant 0 : i32
      %213 = tpu.memref_slice %arg2[%212, %c0_i32_124] : memref<1000x768xf32, #tpu.memory_space<any>> -> memref<1x768xf32, #tpu.memory_space<any>>
      %c5_i32_125 = arith.constant 5 : i32
      %c0_i32_126 = arith.constant 0 : i32
      %214 = tpu.memref_slice %arg9[%c0_i32_121, %c5_i32_125, %c0_i32_126] : memref<4x8x768xf32, #tpu.memory_space<vmem>> -> memref<1x1x768xf32, #tpu.memory_space<vmem>>
      %215 = tpu.memref_squeeze %214 : memref<1x1x768xf32, #tpu.memory_space<vmem>> -> memref<1x768xf32, #tpu.memory_space<vmem>>
      %216 = tpu.memref_slice %arg10[%c0_i32_122, %c5_i32_123] : memref<4x8x!tpu.dma_semaphore, #tpu.memory_space<semaphore_mem>> -> memref<1x1x!tpu.dma_semaphore, #tpu.memory_space<semaphore_mem>>
      %217 = tpu.memref_squeeze %216 : memref<1x1x!tpu.dma_semaphore, #tpu.memory_space<semaphore_mem>> -> memref<!tpu.dma_semaphore, #tpu.memory_space<semaphore_mem>>
      tpu.enqueue_dma source(%213 : memref<1x768xf32, #tpu.memory_space<any>>) target(%215 : memref<1x768xf32, #tpu.memory_space<vmem>>) target_semaphore(%217 : memref<!tpu.dma_semaphore, #tpu.memory_space<semaphore_mem>>)
      %c6_127 = arith.constant 6 : index
      %218 = memref.load %arg1[%c6_127] : memref<16xi32, #tpu.memory_space<smem>>
      %c0_i32_128 = arith.constant 0 : i32
      %c0_i32_129 = arith.constant 0 : i32
      %c6_i32_130 = arith.constant 6 : i32
      %c0_i32_131 = arith.constant 0 : i32
      %219 = tpu.memref_slice %arg2[%218, %c0_i32_131] : memref<1000x768xf32, #tpu.memory_space<any>> -> memref<1x768xf32, #tpu.memory_space<any>>
      %c6_i32_132 = arith.constant 6 : i32
      %c0_i32_133 = arith.constant 0 : i32
      %220 = tpu.memref_slice %arg9[%c0_i32_128, %c6_i32_132, %c0_i32_133] : memref<4x8x768xf32, #tpu.memory_space<vmem>> -> memref<1x1x768xf32, #tpu.memory_space<vmem>>
      %221 = tpu.memref_squeeze %220 : memref<1x1x768xf32, #tpu.memory_space<vmem>> -> memref<1x768xf32, #tpu.memory_space<vmem>>
      %222 = tpu.memref_slice %arg10[%c0_i32_129, %c6_i32_130] : memref<4x8x!tpu.dma_semaphore, #tpu.memory_space<semaphore_mem>> -> memref<1x1x!tpu.dma_semaphore, #tpu.memory_space<semaphore_mem>>
      %223 = tpu.memref_squeeze %222 : memref<1x1x!tpu.dma_semaphore, #tpu.memory_space<semaphore_mem>> -> memref<!tpu.dma_semaphore, #tpu.memory_space<semaphore_mem>>
      tpu.enqueue_dma source(%219 : memref<1x768xf32, #tpu.memory_space<any>>) target(%221 : memref<1x768xf32, #tpu.memory_space<vmem>>) target_semaphore(%223 : memref<!tpu.dma_semaphore, #tpu.memory_space<semaphore_mem>>)
      %c7_134 = arith.constant 7 : index
      %224 = memref.load %arg1[%c7_134] : memref<16xi32, #tpu.memory_space<smem>>
      %c0_i32_135 = arith.constant 0 : i32
      %c0_i32_136 = arith.constant 0 : i32
      %c7_i32_137 = arith.constant 7 : i32
      %c0_i32_138 = arith.constant 0 : i32
      %225 = tpu.memref_slice %arg2[%224, %c0_i32_138] : memref<1000x768xf32, #tpu.memory_space<any>> -> memref<1x768xf32, #tpu.memory_space<any>>
      %c7_i32_139 = arith.constant 7 : i32
      %c0_i32_140 = arith.constant 0 : i32
      %226 = tpu.memref_slice %arg9[%c0_i32_135, %c7_i32_139, %c0_i32_140] : memref<4x8x768xf32, #tpu.memory_space<vmem>> -> memref<1x1x768xf32, #tpu.memory_space<vmem>>
      %227 = tpu.memref_squeeze %226 : memref<1x1x768xf32, #tpu.memory_space<vmem>> -> memref<1x768xf32, #tpu.memory_space<vmem>>
      %228 = tpu.memref_slice %arg10[%c0_i32_136, %c7_i32_137] : memref<4x8x!tpu.dma_semaphore, #tpu.memory_space<semaphore_mem>> -> memref<1x1x!tpu.dma_semaphore, #tpu.memory_space<semaphore_mem>>
      %229 = tpu.memref_squeeze %228 : memref<1x1x!tpu.dma_semaphore, #tpu.memory_space<semaphore_mem>> -> memref<!tpu.dma_semaphore, #tpu.memory_space<semaphore_mem>>
      tpu.enqueue_dma source(%225 : memref<1x768xf32, #tpu.memory_space<any>>) target(%227 : memref<1x768xf32, #tpu.memory_space<vmem>>) target_semaphore(%229 : memref<!tpu.dma_semaphore, #tpu.memory_space<semaphore_mem>>)
      %c8 = arith.constant 8 : index
      %230 = memref.load %arg1[%c8] : memref<16xi32, #tpu.memory_space<smem>>
      %c1_i32_141 = arith.constant 1 : i32
      %c1_i32_142 = arith.constant 1 : i32
      %c0_i32_143 = arith.constant 0 : i32
      %c0_i32_144 = arith.constant 0 : i32
      %231 = tpu.memref_slice %arg2[%230, %c0_i32_144] : memref<1000x768xf32, #tpu.memory_space<any>> -> memref<1x768xf32, #tpu.memory_space<any>>
      %c0_i32_145 = arith.constant 0 : i32
      %c0_i32_146 = arith.constant 0 : i32
      %232 = tpu.memref_slice %arg9[%c1_i32_141, %c0_i32_145, %c0_i32_146] : memref<4x8x768xf32, #tpu.memory_space<vmem>> -> memref<1x1x768xf32, #tpu.memory_space<vmem>>
      %233 = tpu.memref_squeeze %232 : memref<1x1x768xf32, #tpu.memory_space<vmem>> -> memref<1x768xf32, #tpu.memory_space<vmem>>
      %234 = tpu.memref_slice %arg10[%c1_i32_142, %c0_i32_143] : memref<4x8x!tpu.dma_semaphore, #tpu.memory_space<semaphore_mem>> -> memref<1x1x!tpu.dma_semaphore, #tpu.memory_space<semaphore_mem>>
      %235 = tpu.memref_squeeze %234 : memref<1x1x!tpu.dma_semaphore, #tpu.memory_space<semaphore_mem>> -> memref<!tpu.dma_semaphore, #tpu.memory_space<semaphore_mem>>
      tpu.enqueue_dma source(%231 : memref<1x768xf32, #tpu.memory_space<any>>) target(%233 : memref<1x768xf32, #tpu.memory_space<vmem>>) target_semaphore(%235 : memref<!tpu.dma_semaphore, #tpu.memory_space<semaphore_mem>>)
      %c9 = arith.constant 9 : index
      %236 = memref.load %arg1[%c9] : memref<16xi32, #tpu.memory_space<smem>>
      %c1_i32_147 = arith.constant 1 : i32
      %c1_i32_148 = arith.constant 1 : i32
      %c1_i32_149 = arith.constant 1 : i32
      %c0_i32_150 = arith.constant 0 : i32
      %237 = tpu.memref_slice %arg2[%236, %c0_i32_150] : memref<1000x768xf32, #tpu.memory_space<any>> -> memref<1x768xf32, #tpu.memory_space<any>>
      %c1_i32_151 = arith.constant 1 : i32
      %c0_i32_152 = arith.constant 0 : i32
      %238 = tpu.memref_slice %arg9[%c1_i32_147, %c1_i32_151, %c0_i32_152] : memref<4x8x768xf32, #tpu.memory_space<vmem>> -> memref<1x1x768xf32, #tpu.memory_space<vmem>>
      %239 = tpu.memref_squeeze %238 : memref<1x1x768xf32, #tpu.memory_space<vmem>> -> memref<1x768xf32, #tpu.memory_space<vmem>>
      %240 = tpu.memref_slice %arg10[%c1_i32_148, %c1_i32_149] : memref<4x8x!tpu.dma_semaphore, #tpu.memory_space<semaphore_mem>> -> memref<1x1x!tpu.dma_semaphore, #tpu.memory_space<semaphore_mem>>
      %241 = tpu.memref_squeeze %240 : memref<1x1x!tpu.dma_semaphore, #tpu.memory_space<semaphore_mem>> -> memref<!tpu.dma_semaphore, #tpu.memory_space<semaphore_mem>>
      tpu.enqueue_dma source(%237 : memref<1x768xf32, #tpu.memory_space<any>>) target(%239 : memref<1x768xf32, #tpu.memory_space<vmem>>) target_semaphore(%241 : memref<!tpu.dma_semaphore, #tpu.memory_space<semaphore_mem>>)
      %c10 = arith.constant 10 : index
      %242 = memref.load %arg1[%c10] : memref<16xi32, #tpu.memory_space<smem>>
      %c1_i32_153 = arith.constant 1 : i32
      %c1_i32_154 = arith.constant 1 : i32
      %c2_i32_155 = arith.constant 2 : i32
      %c0_i32_156 = arith.constant 0 : i32
      %243 = tpu.memref_slice %arg2[%242, %c0_i32_156] : memref<1000x768xf32, #tpu.memory_space<any>> -> memref<1x768xf32, #tpu.memory_space<any>>
      %c2_i32_157 = arith.constant 2 : i32
      %c0_i32_158 = arith.constant 0 : i32
      %244 = tpu.memref_slice %arg9[%c1_i32_153, %c2_i32_157, %c0_i32_158] : memref<4x8x768xf32, #tpu.memory_space<vmem>> -> memref<1x1x768xf32, #tpu.memory_space<vmem>>
      %245 = tpu.memref_squeeze %244 : memref<1x1x768xf32, #tpu.memory_space<vmem>> -> memref<1x768xf32, #tpu.memory_space<vmem>>
      %246 = tpu.memref_slice %arg10[%c1_i32_154, %c2_i32_155] : memref<4x8x!tpu.dma_semaphore, #tpu.memory_space<semaphore_mem>> -> memref<1x1x!tpu.dma_semaphore, #tpu.memory_space<semaphore_mem>>
      %247 = tpu.memref_squeeze %246 : memref<1x1x!tpu.dma_semaphore, #tpu.memory_space<semaphore_mem>> -> memref<!tpu.dma_semaphore, #tpu.memory_space<semaphore_mem>>
      tpu.enqueue_dma source(%243 : memref<1x768xf32, #tpu.memory_space<any>>) target(%245 : memref<1x768xf32, #tpu.memory_space<vmem>>) target_semaphore(%247 : memref<!tpu.dma_semaphore, #tpu.memory_space<semaphore_mem>>)
      %c11 = arith.constant 11 : index
      %248 = memref.load %arg1[%c11] : memref<16xi32, #tpu.memory_space<smem>>
      %c1_i32_159 = arith.constant 1 : i32
      %c1_i32_160 = arith.constant 1 : i32
      %c3_i32_161 = arith.constant 3 : i32
      %c0_i32_162 = arith.constant 0 : i32
      %249 = tpu.memref_slice %arg2[%248, %c0_i32_162] : memref<1000x768xf32, #tpu.memory_space<any>> -> memref<1x768xf32, #tpu.memory_space<any>>
      %c3_i32_163 = arith.constant 3 : i32
      %c0_i32_164 = arith.constant 0 : i32
      %250 = tpu.memref_slice %arg9[%c1_i32_159, %c3_i32_163, %c0_i32_164] : memref<4x8x768xf32, #tpu.memory_space<vmem>> -> memref<1x1x768xf32, #tpu.memory_space<vmem>>
      %251 = tpu.memref_squeeze %250 : memref<1x1x768xf32, #tpu.memory_space<vmem>> -> memref<1x768xf32, #tpu.memory_space<vmem>>
      %252 = tpu.memref_slice %arg10[%c1_i32_160, %c3_i32_161] : memref<4x8x!tpu.dma_semaphore, #tpu.memory_space<semaphore_mem>> -> memref<1x1x!tpu.dma_semaphore, #tpu.memory_space<semaphore_mem>>
      %253 = tpu.memref_squeeze %252 : memref<1x1x!tpu.dma_semaphore, #tpu.memory_space<semaphore_mem>> -> memref<!tpu.dma_semaphore, #tpu.memory_space<semaphore_mem>>
      tpu.enqueue_dma source(%249 : memref<1x768xf32, #tpu.memory_space<any>>) target(%251 : memref<1x768xf32, #tpu.memory_space<vmem>>) target_semaphore(%253 : memref<!tpu.dma_semaphore, #tpu.memory_space<semaphore_mem>>)
      %c12 = arith.constant 12 : index
      %254 = memref.load %arg1[%c12] : memref<16xi32, #tpu.memory_space<smem>>
      %c1_i32_165 = arith.constant 1 : i32
      %c1_i32_166 = arith.constant 1 : i32
      %c4_i32_167 = arith.constant 4 : i32
      %c0_i32_168 = arith.constant 0 : i32
      %255 = tpu.memref_slice %arg2[%254, %c0_i32_168] : memref<1000x768xf32, #tpu.memory_space<any>> -> memref<1x768xf32, #tpu.memory_space<any>>
      %c4_i32_169 = arith.constant 4 : i32
      %c0_i32_170 = arith.constant 0 : i32
      %256 = tpu.memref_slice %arg9[%c1_i32_165, %c4_i32_169, %c0_i32_170] : memref<4x8x768xf32, #tpu.memory_space<vmem>> -> memref<1x1x768xf32, #tpu.memory_space<vmem>>
      %257 = tpu.memref_squeeze %256 : memref<1x1x768xf32, #tpu.memory_space<vmem>> -> memref<1x768xf32, #tpu.memory_space<vmem>>
      %258 = tpu.memref_slice %arg10[%c1_i32_166, %c4_i32_167] : memref<4x8x!tpu.dma_semaphore, #tpu.memory_space<semaphore_mem>> -> memref<1x1x!tpu.dma_semaphore, #tpu.memory_space<semaphore_mem>>
      %259 = tpu.memref_squeeze %258 : memref<1x1x!tpu.dma_semaphore, #tpu.memory_space<semaphore_mem>> -> memref<!tpu.dma_semaphore, #tpu.memory_space<semaphore_mem>>
      tpu.enqueue_dma source(%255 : memref<1x768xf32, #tpu.memory_space<any>>) target(%257 : memref<1x768xf32, #tpu.memory_space<vmem>>) target_semaphore(%259 : memref<!tpu.dma_semaphore, #tpu.memory_space<semaphore_mem>>)
      %c13 = arith.constant 13 : index
      %260 = memref.load %arg1[%c13] : memref<16xi32, #tpu.memory_space<smem>>
      %c1_i32_171 = arith.constant 1 : i32
      %c1_i32_172 = arith.constant 1 : i32
      %c5_i32_173 = arith.constant 5 : i32
      %c0_i32_174 = arith.constant 0 : i32
      %261 = tpu.memref_slice %arg2[%260, %c0_i32_174] : memref<1000x768xf32, #tpu.memory_space<any>> -> memref<1x768xf32, #tpu.memory_space<any>>
      %c5_i32_175 = arith.constant 5 : i32
      %c0_i32_176 = arith.constant 0 : i32
      %262 = tpu.memref_slice %arg9[%c1_i32_171, %c5_i32_175, %c0_i32_176] : memref<4x8x768xf32, #tpu.memory_space<vmem>> -> memref<1x1x768xf32, #tpu.memory_space<vmem>>
      %263 = tpu.memref_squeeze %262 : memref<1x1x768xf32, #tpu.memory_space<vmem>> -> memref<1x768xf32, #tpu.memory_space<vmem>>
      %264 = tpu.memref_slice %arg10[%c1_i32_172, %c5_i32_173] : memref<4x8x!tpu.dma_semaphore, #tpu.memory_space<semaphore_mem>> -> memref<1x1x!tpu.dma_semaphore, #tpu.memory_space<semaphore_mem>>
      %265 = tpu.memref_squeeze %264 : memref<1x1x!tpu.dma_semaphore, #tpu.memory_space<semaphore_mem>> -> memref<!tpu.dma_semaphore, #tpu.memory_space<semaphore_mem>>
      tpu.enqueue_dma source(%261 : memref<1x768xf32, #tpu.memory_space<any>>) target(%263 : memref<1x768xf32, #tpu.memory_space<vmem>>) target_semaphore(%265 : memref<!tpu.dma_semaphore, #tpu.memory_space<semaphore_mem>>)
      %c14 = arith.constant 14 : index
      %266 = memref.load %arg1[%c14] : memref<16xi32, #tpu.memory_space<smem>>
      %c1_i32_177 = arith.constant 1 : i32
      %c1_i32_178 = arith.constant 1 : i32
      %c6_i32_179 = arith.constant 6 : i32
      %c0_i32_180 = arith.constant 0 : i32
      %267 = tpu.memref_slice %arg2[%266, %c0_i32_180] : memref<1000x768xf32, #tpu.memory_space<any>> -> memref<1x768xf32, #tpu.memory_space<any>>
      %c6_i32_181 = arith.constant 6 : i32
      %c0_i32_182 = arith.constant 0 : i32
      %268 = tpu.memref_slice %arg9[%c1_i32_177, %c6_i32_181, %c0_i32_182] : memref<4x8x768xf32, #tpu.memory_space<vmem>> -> memref<1x1x768xf32, #tpu.memory_space<vmem>>
      %269 = tpu.memref_squeeze %268 : memref<1x1x768xf32, #tpu.memory_space<vmem>> -> memref<1x768xf32, #tpu.memory_space<vmem>>
      %270 = tpu.memref_slice %arg10[%c1_i32_178, %c6_i32_179] : memref<4x8x!tpu.dma_semaphore, #tpu.memory_space<semaphore_mem>> -> memref<1x1x!tpu.dma_semaphore, #tpu.memory_space<semaphore_mem>>
      %271 = tpu.memref_squeeze %270 : memref<1x1x!tpu.dma_semaphore, #tpu.memory_space<semaphore_mem>> -> memref<!tpu.dma_semaphore, #tpu.memory_space<semaphore_mem>>
      tpu.enqueue_dma source(%267 : memref<1x768xf32, #tpu.memory_space<any>>) target(%269 : memref<1x768xf32, #tpu.memory_space<vmem>>) target_semaphore(%271 : memref<!tpu.dma_semaphore, #tpu.memory_space<semaphore_mem>>)
      %c15 = arith.constant 15 : index
      %272 = memref.load %arg1[%c15] : memref<16xi32, #tpu.memory_space<smem>>
      %c1_i32_183 = arith.constant 1 : i32
      %c1_i32_184 = arith.constant 1 : i32
      %c7_i32_185 = arith.constant 7 : i32
      %c0_i32_186 = arith.constant 0 : i32
      %273 = tpu.memref_slice %arg2[%272, %c0_i32_186] : memref<1000x768xf32, #tpu.memory_space<any>> -> memref<1x768xf32, #tpu.memory_space<any>>
      %c7_i32_187 = arith.constant 7 : i32
      %c0_i32_188 = arith.constant 0 : i32
      %274 = tpu.memref_slice %arg9[%c1_i32_183, %c7_i32_187, %c0_i32_188] : memref<4x8x768xf32, #tpu.memory_space<vmem>> -> memref<1x1x768xf32, #tpu.memory_space<vmem>>
      %275 = tpu.memref_squeeze %274 : memref<1x1x768xf32, #tpu.memory_space<vmem>> -> memref<1x768xf32, #tpu.memory_space<vmem>>
      %276 = tpu.memref_slice %arg10[%c1_i32_184, %c7_i32_185] : memref<4x8x!tpu.dma_semaphore, #tpu.memory_space<semaphore_mem>> -> memref<1x1x!tpu.dma_semaphore, #tpu.memory_space<semaphore_mem>>
      %277 = tpu.memref_squeeze %276 : memref<1x1x!tpu.dma_semaphore, #tpu.memory_space<semaphore_mem>> -> memref<!tpu.dma_semaphore, #tpu.memory_space<semaphore_mem>>
      tpu.enqueue_dma source(%273 : memref<1x768xf32, #tpu.memory_space<any>>) target(%275 : memref<1x768xf32, #tpu.memory_space<vmem>>) target_semaphore(%277 : memref<!tpu.dma_semaphore, #tpu.memory_space<semaphore_mem>>)
    } else {
    }
    %c3_i32 = arith.constant 3 : i32
    %3 = arith.addi %arg0, %c3_i32 : i32
    %c2_i32 = arith.constant 2 : i32
    %4 = arith.cmpi slt, %3, %c2_i32 : i32
    %5 = arith.extui %4 : i1 to i32
    %c0_i32_1 = arith.constant 0 : i32
    %6 = arith.cmpi ne, %5, %c0_i32_1 : i32
    scf.if %6 {
      %c4_i32_85 = arith.constant 4 : i32
      %c0_i32_86 = arith.constant 0 : i32
      %182 = arith.cmpi eq, %c4_i32_85, %c0_i32_86 : i32
      %c1_i32_87 = arith.constant 1 : i32
      %183 = arith.select %182, %c1_i32_87, %c4_i32_85 : i32
      %184 = arith.remsi %3, %183 : i32
      %c0_i32_88 = arith.constant 0 : i32
      %185 = arith.cmpi ne, %184, %c0_i32_88 : i32
      %c0_i32_89 = arith.constant 0 : i32
      %186 = arith.cmpi slt, %184, %c0_i32_89 : i32
      %c0_i32_90 = arith.constant 0 : i32
      %187 = arith.cmpi slt, %183, %c0_i32_90 : i32
      %188 = arith.xori %186, %187 : i1
      %189 = arith.andi %188, %185 : i1
      %190 = arith.addi %184, %183 : i32
      %191 = arith.select %189, %190, %184 : i32
      %c8_i32_91 = arith.constant 8 : i32
      %192 = arith.muli %3, %c8_i32_91 : i32
      %c0_i32_92 = arith.constant 0 : i32
      %193 = arith.addi %192, %c0_i32_92 : i32
      %194 = arith.index_cast %193 : i32 to index
      %195 = memref.load %arg1[%194] : memref<16xi32, #tpu.memory_space<smem>>
      %c0_i32_93 = arith.constant 0 : i32
      %c0_i32_94 = arith.constant 0 : i32
      %196 = tpu.memref_slice %arg2[%195, %c0_i32_94] : memref<1000x768xf32, #tpu.memory_space<any>> -> memref<1x768xf32, #tpu.memory_space<any>>
      %c0_i32_95 = arith.constant 0 : i32
      %c0_i32_96 = arith.constant 0 : i32
      %197 = tpu.memref_slice %arg9[%191, %c0_i32_95, %c0_i32_96] : memref<4x8x768xf32, #tpu.memory_space<vmem>> -> memref<1x1x768xf32, #tpu.memory_space<vmem>>
      %198 = tpu.memref_squeeze %197 : memref<1x1x768xf32, #tpu.memory_space<vmem>> -> memref<1x768xf32, #tpu.memory_space<vmem>>
      %199 = tpu.memref_slice %arg10[%191, %c0_i32_93] : memref<4x8x!tpu.dma_semaphore, #tpu.memory_space<semaphore_mem>> -> memref<1x1x!tpu.dma_semaphore, #tpu.memory_space<semaphore_mem>>
      %200 = tpu.memref_squeeze %199 : memref<1x1x!tpu.dma_semaphore, #tpu.memory_space<semaphore_mem>> -> memref<!tpu.dma_semaphore, #tpu.memory_space<semaphore_mem>>
      tpu.enqueue_dma source(%196 : memref<1x768xf32, #tpu.memory_space<any>>) target(%198 : memref<1x768xf32, #tpu.memory_space<vmem>>) target_semaphore(%200 : memref<!tpu.dma_semaphore, #tpu.memory_space<semaphore_mem>>)
      %c1_i32_97 = arith.constant 1 : i32
      %201 = arith.addi %192, %c1_i32_97 : i32
      %202 = arith.index_cast %201 : i32 to index
      %203 = memref.load %arg1[%202] : memref<16xi32, #tpu.memory_space<smem>>
      %c1_i32_98 = arith.constant 1 : i32
      %c0_i32_99 = arith.constant 0 : i32
      %204 = tpu.memref_slice %arg2[%203, %c0_i32_99] : memref<1000x768xf32, #tpu.memory_space<any>> -> memref<1x768xf32, #tpu.memory_space<any>>
      %c1_i32_100 = arith.constant 1 : i32
      %c0_i32_101 = arith.constant 0 : i32
      %205 = tpu.memref_slice %arg9[%191, %c1_i32_100, %c0_i32_101] : memref<4x8x768xf32, #tpu.memory_space<vmem>> -> memref<1x1x768xf32, #tpu.memory_space<vmem>>
      %206 = tpu.memref_squeeze %205 : memref<1x1x768xf32, #tpu.memory_space<vmem>> -> memref<1x768xf32, #tpu.memory_space<vmem>>
      %207 = tpu.memref_slice %arg10[%191, %c1_i32_98] : memref<4x8x!tpu.dma_semaphore, #tpu.memory_space<semaphore_mem>> -> memref<1x1x!tpu.dma_semaphore, #tpu.memory_space<semaphore_mem>>
      %208 = tpu.memref_squeeze %207 : memref<1x1x!tpu.dma_semaphore, #tpu.memory_space<semaphore_mem>> -> memref<!tpu.dma_semaphore, #tpu.memory_space<semaphore_mem>>
      tpu.enqueue_dma source(%204 : memref<1x768xf32, #tpu.memory_space<any>>) target(%206 : memref<1x768xf32, #tpu.memory_space<vmem>>) target_semaphore(%208 : memref<!tpu.dma_semaphore, #tpu.memory_space<semaphore_mem>>)
      %c2_i32_102 = arith.constant 2 : i32
      %209 = arith.addi %192, %c2_i32_102 : i32
      %210 = arith.index_cast %209 : i32 to index
      %211 = memref.load %arg1[%210] : memref<16xi32, #tpu.memory_space<smem>>
      %c2_i32_103 = arith.constant 2 : i32
      %c0_i32_104 = arith.constant 0 : i32
      %212 = tpu.memref_slice %arg2[%211, %c0_i32_104] : memref<1000x768xf32, #tpu.memory_space<any>> -> memref<1x768xf32, #tpu.memory_space<any>>
      %c2_i32_105 = arith.constant 2 : i32
      %c0_i32_106 = arith.constant 0 : i32
      %213 = tpu.memref_slice %arg9[%191, %c2_i32_105, %c0_i32_106] : memref<4x8x768xf32, #tpu.memory_space<vmem>> -> memref<1x1x768xf32, #tpu.memory_space<vmem>>
      %214 = tpu.memref_squeeze %213 : memref<1x1x768xf32, #tpu.memory_space<vmem>> -> memref<1x768xf32, #tpu.memory_space<vmem>>
      %215 = tpu.memref_slice %arg10[%191, %c2_i32_103] : memref<4x8x!tpu.dma_semaphore, #tpu.memory_space<semaphore_mem>> -> memref<1x1x!tpu.dma_semaphore, #tpu.memory_space<semaphore_mem>>
      %216 = tpu.memref_squeeze %215 : memref<1x1x!tpu.dma_semaphore, #tpu.memory_space<semaphore_mem>> -> memref<!tpu.dma_semaphore, #tpu.memory_space<semaphore_mem>>
      tpu.enqueue_dma source(%212 : memref<1x768xf32, #tpu.memory_space<any>>) target(%214 : memref<1x768xf32, #tpu.memory_space<vmem>>) target_semaphore(%216 : memref<!tpu.dma_semaphore, #tpu.memory_space<semaphore_mem>>)
      %c3_i32_107 = arith.constant 3 : i32
      %217 = arith.addi %192, %c3_i32_107 : i32
      %218 = arith.index_cast %217 : i32 to index
      %219 = memref.load %arg1[%218] : memref<16xi32, #tpu.memory_space<smem>>
      %c3_i32_108 = arith.constant 3 : i32
      %c0_i32_109 = arith.constant 0 : i32
      %220 = tpu.memref_slice %arg2[%219, %c0_i32_109] : memref<1000x768xf32, #tpu.memory_space<any>> -> memref<1x768xf32, #tpu.memory_space<any>>
      %c3_i32_110 = arith.constant 3 : i32
      %c0_i32_111 = arith.constant 0 : i32
      %221 = tpu.memref_slice %arg9[%191, %c3_i32_110, %c0_i32_111] : memref<4x8x768xf32, #tpu.memory_space<vmem>> -> memref<1x1x768xf32, #tpu.memory_space<vmem>>
      %222 = tpu.memref_squeeze %221 : memref<1x1x768xf32, #tpu.memory_space<vmem>> -> memref<1x768xf32, #tpu.memory_space<vmem>>
      %223 = tpu.memref_slice %arg10[%191, %c3_i32_108] : memref<4x8x!tpu.dma_semaphore, #tpu.memory_space<semaphore_mem>> -> memref<1x1x!tpu.dma_semaphore, #tpu.memory_space<semaphore_mem>>
      %224 = tpu.memref_squeeze %223 : memref<1x1x!tpu.dma_semaphore, #tpu.memory_space<semaphore_mem>> -> memref<!tpu.dma_semaphore, #tpu.memory_space<semaphore_mem>>
      tpu.enqueue_dma source(%220 : memref<1x768xf32, #tpu.memory_space<any>>) target(%222 : memref<1x768xf32, #tpu.memory_space<vmem>>) target_semaphore(%224 : memref<!tpu.dma_semaphore, #tpu.memory_space<semaphore_mem>>)
      %c4_i32_112 = arith.constant 4 : i32
      %225 = arith.addi %192, %c4_i32_112 : i32
      %226 = arith.index_cast %225 : i32 to index
      %227 = memref.load %arg1[%226] : memref<16xi32, #tpu.memory_space<smem>>
      %c4_i32_113 = arith.constant 4 : i32
      %c0_i32_114 = arith.constant 0 : i32
      %228 = tpu.memref_slice %arg2[%227, %c0_i32_114] : memref<1000x768xf32, #tpu.memory_space<any>> -> memref<1x768xf32, #tpu.memory_space<any>>
      %c4_i32_115 = arith.constant 4 : i32
      %c0_i32_116 = arith.constant 0 : i32
      %229 = tpu.memref_slice %arg9[%191, %c4_i32_115, %c0_i32_116] : memref<4x8x768xf32, #tpu.memory_space<vmem>> -> memref<1x1x768xf32, #tpu.memory_space<vmem>>
      %230 = tpu.memref_squeeze %229 : memref<1x1x768xf32, #tpu.memory_space<vmem>> -> memref<1x768xf32, #tpu.memory_space<vmem>>
      %231 = tpu.memref_slice %arg10[%191, %c4_i32_113] : memref<4x8x!tpu.dma_semaphore, #tpu.memory_space<semaphore_mem>> -> memref<1x1x!tpu.dma_semaphore, #tpu.memory_space<semaphore_mem>>
      %232 = tpu.memref_squeeze %231 : memref<1x1x!tpu.dma_semaphore, #tpu.memory_space<semaphore_mem>> -> memref<!tpu.dma_semaphore, #tpu.memory_space<semaphore_mem>>
      tpu.enqueue_dma source(%228 : memref<1x768xf32, #tpu.memory_space<any>>) target(%230 : memref<1x768xf32, #tpu.memory_space<vmem>>) target_semaphore(%232 : memref<!tpu.dma_semaphore, #tpu.memory_space<semaphore_mem>>)
      %c5_i32_117 = arith.constant 5 : i32
      %233 = arith.addi %192, %c5_i32_117 : i32
      %234 = arith.index_cast %233 : i32 to index
      %235 = memref.load %arg1[%234] : memref<16xi32, #tpu.memory_space<smem>>
      %c5_i32_118 = arith.constant 5 : i32
      %c0_i32_119 = arith.constant 0 : i32
      %236 = tpu.memref_slice %arg2[%235, %c0_i32_119] : memref<1000x768xf32, #tpu.memory_space<any>> -> memref<1x768xf32, #tpu.memory_space<any>>
      %c5_i32_120 = arith.constant 5 : i32
      %c0_i32_121 = arith.constant 0 : i32
      %237 = tpu.memref_slice %arg9[%191, %c5_i32_120, %c0_i32_121] : memref<4x8x768xf32, #tpu.memory_space<vmem>> -> memref<1x1x768xf32, #tpu.memory_space<vmem>>
      %238 = tpu.memref_squeeze %237 : memref<1x1x768xf32, #tpu.memory_space<vmem>> -> memref<1x768xf32, #tpu.memory_space<vmem>>
      %239 = tpu.memref_slice %arg10[%191, %c5_i32_118] : memref<4x8x!tpu.dma_semaphore, #tpu.memory_space<semaphore_mem>> -> memref<1x1x!tpu.dma_semaphore, #tpu.memory_space<semaphore_mem>>
      %240 = tpu.memref_squeeze %239 : memref<1x1x!tpu.dma_semaphore, #tpu.memory_space<semaphore_mem>> -> memref<!tpu.dma_semaphore, #tpu.memory_space<semaphore_mem>>
      tpu.enqueue_dma source(%236 : memref<1x768xf32, #tpu.memory_space<any>>) target(%238 : memref<1x768xf32, #tpu.memory_space<vmem>>) target_semaphore(%240 : memref<!tpu.dma_semaphore, #tpu.memory_space<semaphore_mem>>)
      %c6_i32_122 = arith.constant 6 : i32
      %241 = arith.addi %192, %c6_i32_122 : i32
      %242 = arith.index_cast %241 : i32 to index
      %243 = memref.load %arg1[%242] : memref<16xi32, #tpu.memory_space<smem>>
      %c6_i32_123 = arith.constant 6 : i32
      %c0_i32_124 = arith.constant 0 : i32
      %244 = tpu.memref_slice %arg2[%243, %c0_i32_124] : memref<1000x768xf32, #tpu.memory_space<any>> -> memref<1x768xf32, #tpu.memory_space<any>>
      %c6_i32_125 = arith.constant 6 : i32
      %c0_i32_126 = arith.constant 0 : i32
      %245 = tpu.memref_slice %arg9[%191, %c6_i32_125, %c0_i32_126] : memref<4x8x768xf32, #tpu.memory_space<vmem>> -> memref<1x1x768xf32, #tpu.memory_space<vmem>>
      %246 = tpu.memref_squeeze %245 : memref<1x1x768xf32, #tpu.memory_space<vmem>> -> memref<1x768xf32, #tpu.memory_space<vmem>>
      %247 = tpu.memref_slice %arg10[%191, %c6_i32_123] : memref<4x8x!tpu.dma_semaphore, #tpu.memory_space<semaphore_mem>> -> memref<1x1x!tpu.dma_semaphore, #tpu.memory_space<semaphore_mem>>
      %248 = tpu.memref_squeeze %247 : memref<1x1x!tpu.dma_semaphore, #tpu.memory_space<semaphore_mem>> -> memref<!tpu.dma_semaphore, #tpu.memory_space<semaphore_mem>>
      tpu.enqueue_dma source(%244 : memref<1x768xf32, #tpu.memory_space<any>>) target(%246 : memref<1x768xf32, #tpu.memory_space<vmem>>) target_semaphore(%248 : memref<!tpu.dma_semaphore, #tpu.memory_space<semaphore_mem>>)
      %c7_i32_127 = arith.constant 7 : i32
      %249 = arith.addi %192, %c7_i32_127 : i32
      %250 = arith.index_cast %249 : i32 to index
      %251 = memref.load %arg1[%250] : memref<16xi32, #tpu.memory_space<smem>>
      %c7_i32_128 = arith.constant 7 : i32
      %c0_i32_129 = arith.constant 0 : i32
      %252 = tpu.memref_slice %arg2[%251, %c0_i32_129] : memref<1000x768xf32, #tpu.memory_space<any>> -> memref<1x768xf32, #tpu.memory_space<any>>
      %c7_i32_130 = arith.constant 7 : i32
      %c0_i32_131 = arith.constant 0 : i32
      %253 = tpu.memref_slice %arg9[%191, %c7_i32_130, %c0_i32_131] : memref<4x8x768xf32, #tpu.memory_space<vmem>> -> memref<1x1x768xf32, #tpu.memory_space<vmem>>
      %254 = tpu.memref_squeeze %253 : memref<1x1x768xf32, #tpu.memory_space<vmem>> -> memref<1x768xf32, #tpu.memory_space<vmem>>
      %255 = tpu.memref_slice %arg10[%191, %c7_i32_128] : memref<4x8x!tpu.dma_semaphore, #tpu.memory_space<semaphore_mem>> -> memref<1x1x!tpu.dma_semaphore, #tpu.memory_space<semaphore_mem>>
      %256 = tpu.memref_squeeze %255 : memref<1x1x!tpu.dma_semaphore, #tpu.memory_space<semaphore_mem>> -> memref<!tpu.dma_semaphore, #tpu.memory_space<semaphore_mem>>
      tpu.enqueue_dma source(%252 : memref<1x768xf32, #tpu.memory_space<any>>) target(%254 : memref<1x768xf32, #tpu.memory_space<vmem>>) target_semaphore(%256 : memref<!tpu.dma_semaphore, #tpu.memory_space<semaphore_mem>>)
    } else {
    }
    %c4_i32 = arith.constant 4 : i32
    %c0_i32_2 = arith.constant 0 : i32
    %7 = arith.cmpi eq, %c4_i32, %c0_i32_2 : i32
    %c1_i32 = arith.constant 1 : i32
    %8 = arith.select %7, %c1_i32, %c4_i32 : i32
    %9 = arith.remsi %arg0, %8 : i32
    %c0_i32_3 = arith.constant 0 : i32
    %10 = arith.cmpi ne, %9, %c0_i32_3 : i32
    %c0_i32_4 = arith.constant 0 : i32
    %11 = arith.cmpi slt, %9, %c0_i32_4 : i32
    %c0_i32_5 = arith.constant 0 : i32
    %12 = arith.cmpi slt, %8, %c0_i32_5 : i32
    %13 = arith.xori %11, %12 : i1
    %14 = arith.andi %13, %10 : i1
    %15 = arith.addi %9, %8 : i32
    %16 = arith.select %14, %15, %9 : i32
    %c0_i32_6 = arith.constant 0 : i32
    %c0_i32_7 = arith.constant 0 : i32
    %c0_i32_8 = arith.constant 0 : i32
    %17 = tpu.memref_slice %arg2[%c0_i32_7, %c0_i32_8] : memref<1000x768xf32, #tpu.memory_space<any>> -> memref<1x768xf32, #tpu.memory_space<any>>
    %c0_i32_9 = arith.constant 0 : i32
    %c0_i32_10 = arith.constant 0 : i32
    %18 = tpu.memref_slice %arg9[%16, %c0_i32_9, %c0_i32_10] : memref<4x8x768xf32, #tpu.memory_space<vmem>> -> memref<1x1x768xf32, #tpu.memory_space<vmem>>
    %19 = tpu.memref_squeeze %18 : memref<1x1x768xf32, #tpu.memory_space<vmem>> -> memref<1x768xf32, #tpu.memory_space<vmem>>
    %20 = tpu.memref_slice %arg10[%16, %c0_i32_6] : memref<4x8x!tpu.dma_semaphore, #tpu.memory_space<semaphore_mem>> -> memref<1x1x!tpu.dma_semaphore, #tpu.memory_space<semaphore_mem>>
    %21 = tpu.memref_squeeze %20 : memref<1x1x!tpu.dma_semaphore, #tpu.memory_space<semaphore_mem>> -> memref<!tpu.dma_semaphore, #tpu.memory_space<semaphore_mem>>
    tpu.wait_dma2 semaphore(%21 : memref<!tpu.dma_semaphore, #tpu.memory_space<semaphore_mem>>) src(%17 : memref<1x768xf32, #tpu.memory_space<any>>) dst(%19 : memref<1x768xf32, #tpu.memory_space<vmem>>)
    %c1_i32_11 = arith.constant 1 : i32
    %c0_i32_12 = arith.constant 0 : i32
    %c0_i32_13 = arith.constant 0 : i32
    %22 = tpu.memref_slice %arg2[%c0_i32_12, %c0_i32_13] : memref<1000x768xf32, #tpu.memory_space<any>> -> memref<1x768xf32, #tpu.memory_space<any>>
    %c1_i32_14 = arith.constant 1 : i32
    %c0_i32_15 = arith.constant 0 : i32
    %23 = tpu.memref_slice %arg9[%16, %c1_i32_14, %c0_i32_15] : memref<4x8x768xf32, #tpu.memory_space<vmem>> -> memref<1x1x768xf32, #tpu.memory_space<vmem>>
    %24 = tpu.memref_squeeze %23 : memref<1x1x768xf32, #tpu.memory_space<vmem>> -> memref<1x768xf32, #tpu.memory_space<vmem>>
    %25 = tpu.memref_slice %arg10[%16, %c1_i32_11] : memref<4x8x!tpu.dma_semaphore, #tpu.memory_space<semaphore_mem>> -> memref<1x1x!tpu.dma_semaphore, #tpu.memory_space<semaphore_mem>>
    %26 = tpu.memref_squeeze %25 : memref<1x1x!tpu.dma_semaphore, #tpu.memory_space<semaphore_mem>> -> memref<!tpu.dma_semaphore, #tpu.memory_space<semaphore_mem>>
    tpu.wait_dma2 semaphore(%26 : memref<!tpu.dma_semaphore, #tpu.memory_space<semaphore_mem>>) src(%22 : memref<1x768xf32, #tpu.memory_space<any>>) dst(%24 : memref<1x768xf32, #tpu.memory_space<vmem>>)
    %c2_i32_16 = arith.constant 2 : i32
    %c0_i32_17 = arith.constant 0 : i32
    %c0_i32_18 = arith.constant 0 : i32
    %27 = tpu.memref_slice %arg2[%c0_i32_17, %c0_i32_18] : memref<1000x768xf32, #tpu.memory_space<any>> -> memref<1x768xf32, #tpu.memory_space<any>>
    %c2_i32_19 = arith.constant 2 : i32
    %c0_i32_20 = arith.constant 0 : i32
    %28 = tpu.memref_slice %arg9[%16, %c2_i32_19, %c0_i32_20] : memref<4x8x768xf32, #tpu.memory_space<vmem>> -> memref<1x1x768xf32, #tpu.memory_space<vmem>>
    %29 = tpu.memref_squeeze %28 : memref<1x1x768xf32, #tpu.memory_space<vmem>> -> memref<1x768xf32, #tpu.memory_space<vmem>>
    %30 = tpu.memref_slice %arg10[%16, %c2_i32_16] : memref<4x8x!tpu.dma_semaphore, #tpu.memory_space<semaphore_mem>> -> memref<1x1x!tpu.dma_semaphore, #tpu.memory_space<semaphore_mem>>
    %31 = tpu.memref_squeeze %30 : memref<1x1x!tpu.dma_semaphore, #tpu.memory_space<semaphore_mem>> -> memref<!tpu.dma_semaphore, #tpu.memory_space<semaphore_mem>>
    tpu.wait_dma2 semaphore(%31 : memref<!tpu.dma_semaphore, #tpu.memory_space<semaphore_mem>>) src(%27 : memref<1x768xf32, #tpu.memory_space<any>>) dst(%29 : memref<1x768xf32, #tpu.memory_space<vmem>>)
    %c3_i32_21 = arith.constant 3 : i32
    %c0_i32_22 = arith.constant 0 : i32
    %c0_i32_23 = arith.constant 0 : i32
    %32 = tpu.memref_slice %arg2[%c0_i32_22, %c0_i32_23] : memref<1000x768xf32, #tpu.memory_space<any>> -> memref<1x768xf32, #tpu.memory_space<any>>
    %c3_i32_24 = arith.constant 3 : i32
    %c0_i32_25 = arith.constant 0 : i32
    %33 = tpu.memref_slice %arg9[%16, %c3_i32_24, %c0_i32_25] : memref<4x8x768xf32, #tpu.memory_space<vmem>> -> memref<1x1x768xf32, #tpu.memory_space<vmem>>
    %34 = tpu.memref_squeeze %33 : memref<1x1x768xf32, #tpu.memory_space<vmem>> -> memref<1x768xf32, #tpu.memory_space<vmem>>
    %35 = tpu.memref_slice %arg10[%16, %c3_i32_21] : memref<4x8x!tpu.dma_semaphore, #tpu.memory_space<semaphore_mem>> -> memref<1x1x!tpu.dma_semaphore, #tpu.memory_space<semaphore_mem>>
    %36 = tpu.memref_squeeze %35 : memref<1x1x!tpu.dma_semaphore, #tpu.memory_space<semaphore_mem>> -> memref<!tpu.dma_semaphore, #tpu.memory_space<semaphore_mem>>
    tpu.wait_dma2 semaphore(%36 : memref<!tpu.dma_semaphore, #tpu.memory_space<semaphore_mem>>) src(%32 : memref<1x768xf32, #tpu.memory_space<any>>) dst(%34 : memref<1x768xf32, #tpu.memory_space<vmem>>)
    %c4_i32_26 = arith.constant 4 : i32
    %c0_i32_27 = arith.constant 0 : i32
    %c0_i32_28 = arith.constant 0 : i32
    %37 = tpu.memref_slice %arg2[%c0_i32_27, %c0_i32_28] : memref<1000x768xf32, #tpu.memory_space<any>> -> memref<1x768xf32, #tpu.memory_space<any>>
    %c4_i32_29 = arith.constant 4 : i32
    %c0_i32_30 = arith.constant 0 : i32
    %38 = tpu.memref_slice %arg9[%16, %c4_i32_29, %c0_i32_30] : memref<4x8x768xf32, #tpu.memory_space<vmem>> -> memref<1x1x768xf32, #tpu.memory_space<vmem>>
    %39 = tpu.memref_squeeze %38 : memref<1x1x768xf32, #tpu.memory_space<vmem>> -> memref<1x768xf32, #tpu.memory_space<vmem>>
    %40 = tpu.memref_slice %arg10[%16, %c4_i32_26] : memref<4x8x!tpu.dma_semaphore, #tpu.memory_space<semaphore_mem>> -> memref<1x1x!tpu.dma_semaphore, #tpu.memory_space<semaphore_mem>>
    %41 = tpu.memref_squeeze %40 : memref<1x1x!tpu.dma_semaphore, #tpu.memory_space<semaphore_mem>> -> memref<!tpu.dma_semaphore, #tpu.memory_space<semaphore_mem>>
    tpu.wait_dma2 semaphore(%41 : memref<!tpu.dma_semaphore, #tpu.memory_space<semaphore_mem>>) src(%37 : memref<1x768xf32, #tpu.memory_space<any>>) dst(%39 : memref<1x768xf32, #tpu.memory_space<vmem>>)
    %c5_i32 = arith.constant 5 : i32
    %c0_i32_31 = arith.constant 0 : i32
    %c0_i32_32 = arith.constant 0 : i32
    %42 = tpu.memref_slice %arg2[%c0_i32_31, %c0_i32_32] : memref<1000x768xf32, #tpu.memory_space<any>> -> memref<1x768xf32, #tpu.memory_space<any>>
    %c5_i32_33 = arith.constant 5 : i32
    %c0_i32_34 = arith.constant 0 : i32
    %43 = tpu.memref_slice %arg9[%16, %c5_i32_33, %c0_i32_34] : memref<4x8x768xf32, #tpu.memory_space<vmem>> -> memref<1x1x768xf32, #tpu.memory_space<vmem>>
    %44 = tpu.memref_squeeze %43 : memref<1x1x768xf32, #tpu.memory_space<vmem>> -> memref<1x768xf32, #tpu.memory_space<vmem>>
    %45 = tpu.memref_slice %arg10[%16, %c5_i32] : memref<4x8x!tpu.dma_semaphore, #tpu.memory_space<semaphore_mem>> -> memref<1x1x!tpu.dma_semaphore, #tpu.memory_space<semaphore_mem>>
    %46 = tpu.memref_squeeze %45 : memref<1x1x!tpu.dma_semaphore, #tpu.memory_space<semaphore_mem>> -> memref<!tpu.dma_semaphore, #tpu.memory_space<semaphore_mem>>
    tpu.wait_dma2 semaphore(%46 : memref<!tpu.dma_semaphore, #tpu.memory_space<semaphore_mem>>) src(%42 : memref<1x768xf32, #tpu.memory_space<any>>) dst(%44 : memref<1x768xf32, #tpu.memory_space<vmem>>)
    %c6_i32 = arith.constant 6 : i32
    %c0_i32_35 = arith.constant 0 : i32
    %c0_i32_36 = arith.constant 0 : i32
    %47 = tpu.memref_slice %arg2[%c0_i32_35, %c0_i32_36] : memref<1000x768xf32, #tpu.memory_space<any>> -> memref<1x768xf32, #tpu.memory_space<any>>
    %c6_i32_37 = arith.constant 6 : i32
    %c0_i32_38 = arith.constant 0 : i32
    %48 = tpu.memref_slice %arg9[%16, %c6_i32_37, %c0_i32_38] : memref<4x8x768xf32, #tpu.memory_space<vmem>> -> memref<1x1x768xf32, #tpu.memory_space<vmem>>
    %49 = tpu.memref_squeeze %48 : memref<1x1x768xf32, #tpu.memory_space<vmem>> -> memref<1x768xf32, #tpu.memory_space<vmem>>
    %50 = tpu.memref_slice %arg10[%16, %c6_i32] : memref<4x8x!tpu.dma_semaphore, #tpu.memory_space<semaphore_mem>> -> memref<1x1x!tpu.dma_semaphore, #tpu.memory_space<semaphore_mem>>
    %51 = tpu.memref_squeeze %50 : memref<1x1x!tpu.dma_semaphore, #tpu.memory_space<semaphore_mem>> -> memref<!tpu.dma_semaphore, #tpu.memory_space<semaphore_mem>>
    tpu.wait_dma2 semaphore(%51 : memref<!tpu.dma_semaphore, #tpu.memory_space<semaphore_mem>>) src(%47 : memref<1x768xf32, #tpu.memory_space<any>>) dst(%49 : memref<1x768xf32, #tpu.memory_space<vmem>>)
    %c7_i32 = arith.constant 7 : i32
    %c0_i32_39 = arith.constant 0 : i32
    %c0_i32_40 = arith.constant 0 : i32
    %52 = tpu.memref_slice %arg2[%c0_i32_39, %c0_i32_40] : memref<1000x768xf32, #tpu.memory_space<any>> -> memref<1x768xf32, #tpu.memory_space<any>>
    %c7_i32_41 = arith.constant 7 : i32
    %c0_i32_42 = arith.constant 0 : i32
    %53 = tpu.memref_slice %arg9[%16, %c7_i32_41, %c0_i32_42] : memref<4x8x768xf32, #tpu.memory_space<vmem>> -> memref<1x1x768xf32, #tpu.memory_space<vmem>>
    %54 = tpu.memref_squeeze %53 : memref<1x1x768xf32, #tpu.memory_space<vmem>> -> memref<1x768xf32, #tpu.memory_space<vmem>>
    %55 = tpu.memref_slice %arg10[%16, %c7_i32] : memref<4x8x!tpu.dma_semaphore, #tpu.memory_space<semaphore_mem>> -> memref<1x1x!tpu.dma_semaphore, #tpu.memory_space<semaphore_mem>>
    %56 = tpu.memref_squeeze %55 : memref<1x1x!tpu.dma_semaphore, #tpu.memory_space<semaphore_mem>> -> memref<!tpu.dma_semaphore, #tpu.memory_space<semaphore_mem>>
    tpu.wait_dma2 semaphore(%56 : memref<!tpu.dma_semaphore, #tpu.memory_space<semaphore_mem>>) src(%52 : memref<1x768xf32, #tpu.memory_space<any>>) dst(%54 : memref<1x768xf32, #tpu.memory_space<vmem>>)
    %57 = arith.index_cast %16 : i32 to index
    %c0 = arith.constant 0 : index
    %c0_43 = arith.constant 0 : index
    %58 = vector.load %arg9[%57, %c0, %c0_43] : memref<4x8x768xf32, #tpu.memory_space<vmem>>, vector<1x8x768xf32>
    %59 = vector.shape_cast %58 : vector<1x8x768xf32> to vector<8x768xf32>
    %c8_i32 = arith.constant 8 : i32
    %60 = arith.muli %arg0, %c8_i32 : i32
    %61 = tpu.iota {dimensions = array<i32: 0>} : vector<8x1xi32>
    %62 = vector.broadcast %60 : i32 to vector<8x1xi32>
    %63 = arith.addi %62, %61 : vector<8x1xi32>
    %c8_i32_44 = arith.constant 8 : i32
    %c0_i32_45 = arith.constant 0 : i32
    %64 = arith.cmpi eq, %c8_i32_44, %c0_i32_45 : i32
    %c1_i32_46 = arith.constant 1 : i32
    %65 = arith.select %64, %c1_i32_46, %c8_i32_44 : i32
    %66 = vector.broadcast %65 : i32 to vector<8x1xi32>
    %67 = arith.remsi %63, %66 : vector<8x1xi32>
    %c0_i32_47 = arith.constant 0 : i32
    %68 = vector.broadcast %c0_i32_47 : i32 to vector<8x1xi32>
    %69 = arith.cmpi ne, %67, %68 : vector<8x1xi32>
    %c0_i32_48 = arith.constant 0 : i32
    %70 = vector.broadcast %c0_i32_48 : i32 to vector<8x1xi32>
    %71 = arith.cmpi slt, %67, %70 : vector<8x1xi32>
    %c0_i32_49 = arith.constant 0 : i32
    %72 = arith.cmpi slt, %65, %c0_i32_49 : i32
    %73 = vector.broadcast %72 : i1 to vector<8x1xi1>
    %74 = vector.broadcast %73 : vector<8x1xi1> to vector<8x1xi1>
    %75 = arith.xori %71, %74 : vector<8x1xi1>
    %76 = arith.andi %75, %69 : vector<8x1xi1>
    %77 = vector.broadcast %65 : i32 to vector<8x1xi32>
    %78 = arith.addi %67, %77 : vector<8x1xi32>
    %79 = arith.select %76, %78, %67 : vector<8x1xi1>, vector<8x1xi32>
    %cst = arith.constant 0.000000e+00 : f32
    %80 = vector.broadcast %cst : f32 to vector<8x768xf32>
    %c0_i32_50 = arith.constant 0 : i32
    %81 = vector.broadcast %c0_i32_50 : i32 to vector<8x1xi32>
    %82 = arith.cmpi eq, %79, %81 : vector<8x1xi32>
    %c0_51 = arith.constant 0 : index
    %c0_52 = arith.constant 0 : index
    %83 = vector.load %arg3[%c0_51, %c0_52] : memref<10x768xf32, #tpu.memory_space<vmem>>, vector<1x768xf32>
    %84 = vector.shape_cast %82 : vector<8x1xi1> to vector<8x1xi1>
    %85 = vector.broadcast %84 : vector<8x1xi1> to vector<8x768xi1>
    %86 = vector.shape_cast %83 : vector<1x768xf32> to vector<1x768xf32>
    %87 = vector.broadcast %86 : vector<1x768xf32> to vector<8x768xf32>
    %88 = arith.select %85, %87, %80 : vector<8x768xi1>, vector<8x768xf32>
    %c1_i32_53 = arith.constant 1 : i32
    %89 = vector.broadcast %c1_i32_53 : i32 to vector<8x1xi32>
    %90 = arith.cmpi eq, %79, %89 : vector<8x1xi32>
    %c1 = arith.constant 1 : index
    %c0_54 = arith.constant 0 : index
    %91 = vector.load %arg3[%c1, %c0_54] : memref<10x768xf32, #tpu.memory_space<vmem>>, vector<1x768xf32>
    %92 = vector.shape_cast %90 : vector<8x1xi1> to vector<8x1xi1>
    %93 = vector.broadcast %92 : vector<8x1xi1> to vector<8x768xi1>
    %94 = vector.shape_cast %91 : vector<1x768xf32> to vector<1x768xf32>
    %95 = vector.broadcast %94 : vector<1x768xf32> to vector<8x768xf32>
    %96 = arith.select %93, %95, %88 : vector<8x768xi1>, vector<8x768xf32>
    %c2_i32_55 = arith.constant 2 : i32
    %97 = vector.broadcast %c2_i32_55 : i32 to vector<8x1xi32>
    %98 = arith.cmpi eq, %79, %97 : vector<8x1xi32>
    %c2 = arith.constant 2 : index
    %c0_56 = arith.constant 0 : index
    %99 = vector.load %arg3[%c2, %c0_56] : memref<10x768xf32, #tpu.memory_space<vmem>>, vector<1x768xf32>
    %100 = vector.shape_cast %98 : vector<8x1xi1> to vector<8x1xi1>
    %101 = vector.broadcast %100 : vector<8x1xi1> to vector<8x768xi1>
    %102 = vector.shape_cast %99 : vector<1x768xf32> to vector<1x768xf32>
    %103 = vector.broadcast %102 : vector<1x768xf32> to vector<8x768xf32>
    %104 = arith.select %101, %103, %96 : vector<8x768xi1>, vector<8x768xf32>
    %c3_i32_57 = arith.constant 3 : i32
    %105 = vector.broadcast %c3_i32_57 : i32 to vector<8x1xi32>
    %106 = arith.cmpi eq, %79, %105 : vector<8x1xi32>
    %c3 = arith.constant 3 : index
    %c0_58 = arith.constant 0 : index
    %107 = vector.load %arg3[%c3, %c0_58] : memref<10x768xf32, #tpu.memory_space<vmem>>, vector<1x768xf32>
    %108 = vector.shape_cast %106 : vector<8x1xi1> to vector<8x1xi1>
    %109 = vector.broadcast %108 : vector<8x1xi1> to vector<8x768xi1>
    %110 = vector.shape_cast %107 : vector<1x768xf32> to vector<1x768xf32>
    %111 = vector.broadcast %110 : vector<1x768xf32> to vector<8x768xf32>
    %112 = arith.select %109, %111, %104 : vector<8x768xi1>, vector<8x768xf32>
    %c4_i32_59 = arith.constant 4 : i32
    %113 = vector.broadcast %c4_i32_59 : i32 to vector<8x1xi32>
    %114 = arith.cmpi eq, %79, %113 : vector<8x1xi32>
    %c4 = arith.constant 4 : index
    %c0_60 = arith.constant 0 : index
    %115 = vector.load %arg3[%c4, %c0_60] : memref<10x768xf32, #tpu.memory_space<vmem>>, vector<1x768xf32>
    %116 = vector.shape_cast %114 : vector<8x1xi1> to vector<8x1xi1>
    %117 = vector.broadcast %116 : vector<8x1xi1> to vector<8x768xi1>
    %118 = vector.shape_cast %115 : vector<1x768xf32> to vector<1x768xf32>
    %119 = vector.broadcast %118 : vector<1x768xf32> to vector<8x768xf32>
    %120 = arith.select %117, %119, %112 : vector<8x768xi1>, vector<8x768xf32>
    %c5_i32_61 = arith.constant 5 : i32
    %121 = vector.broadcast %c5_i32_61 : i32 to vector<8x1xi32>
    %122 = arith.cmpi eq, %79, %121 : vector<8x1xi32>
    %c5 = arith.constant 5 : index
    %c0_62 = arith.constant 0 : index
    %123 = vector.load %arg3[%c5, %c0_62] : memref<10x768xf32, #tpu.memory_space<vmem>>, vector<1x768xf32>
    %124 = vector.shape_cast %122 : vector<8x1xi1> to vector<8x1xi1>
    %125 = vector.broadcast %124 : vector<8x1xi1> to vector<8x768xi1>
    %126 = vector.shape_cast %123 : vector<1x768xf32> to vector<1x768xf32>
    %127 = vector.broadcast %126 : vector<1x768xf32> to vector<8x768xf32>
    %128 = arith.select %125, %127, %120 : vector<8x768xi1>, vector<8x768xf32>
    %c6_i32_63 = arith.constant 6 : i32
    %129 = vector.broadcast %c6_i32_63 : i32 to vector<8x1xi32>
    %130 = arith.cmpi eq, %79, %129 : vector<8x1xi32>
    %c6 = arith.constant 6 : index
    %c0_64 = arith.constant 0 : index
    %131 = vector.load %arg3[%c6, %c0_64] : memref<10x768xf32, #tpu.memory_space<vmem>>, vector<1x768xf32>
    %132 = vector.shape_cast %130 : vector<8x1xi1> to vector<8x1xi1>
    %133 = vector.broadcast %132 : vector<8x1xi1> to vector<8x768xi1>
    %134 = vector.shape_cast %131 : vector<1x768xf32> to vector<1x768xf32>
    %135 = vector.broadcast %134 : vector<1x768xf32> to vector<8x768xf32>
    %136 = arith.select %133, %135, %128 : vector<8x768xi1>, vector<8x768xf32>
    %c7_i32_65 = arith.constant 7 : i32
    %137 = vector.broadcast %c7_i32_65 : i32 to vector<8x1xi32>
    %138 = arith.cmpi eq, %79, %137 : vector<8x1xi32>
    %c7 = arith.constant 7 : index
    %c0_66 = arith.constant 0 : index
    %139 = vector.load %arg3[%c7, %c0_66] : memref<10x768xf32, #tpu.memory_space<vmem>>, vector<1x768xf32>
    %140 = vector.shape_cast %138 : vector<8x1xi1> to vector<8x1xi1>
    %141 = vector.broadcast %140 : vector<8x1xi1> to vector<8x768xi1>
    %142 = vector.shape_cast %139 : vector<1x768xf32> to vector<1x768xf32>
    %143 = vector.broadcast %142 : vector<1x768xf32> to vector<8x768xf32>
    %144 = arith.select %141, %143, %136 : vector<8x768xi1>, vector<8x768xf32>
    %c0_67 = arith.constant 0 : index
    %c0_68 = arith.constant 0 : index
    %145 = vector.load %arg7[%c0_67, %c0_68] : memref<8x1xi32, #tpu.memory_space<vmem>>, vector<8x1xi32>
    %c0_i32_69 = arith.constant 0 : i32
    %146 = vector.broadcast %c0_i32_69 : i32 to vector<8x1xi32>
    %147 = arith.cmpi eq, %145, %146 : vector<8x1xi32>
    %c0_70 = arith.constant 0 : index
    %c0_71 = arith.constant 0 : index
    %148 = vector.load %arg4[%c0_70, %c0_71] : memref<2x768xf32, #tpu.memory_space<vmem>>, vector<1x768xf32>
    %c1_72 = arith.constant 1 : index
    %c0_73 = arith.constant 0 : index
    %149 = vector.load %arg4[%c1_72, %c0_73] : memref<2x768xf32, #tpu.memory_space<vmem>>, vector<1x768xf32>
    %150 = vector.shape_cast %147 : vector<8x1xi1> to vector<8x1xi1>
    %151 = vector.broadcast %150 : vector<8x1xi1> to vector<8x768xi1>
    %152 = vector.shape_cast %148 : vector<1x768xf32> to vector<1x768xf32>
    %153 = vector.broadcast %152 : vector<1x768xf32> to vector<8x768xf32>
    %154 = vector.shape_cast %149 : vector<1x768xf32> to vector<1x768xf32>
    %155 = vector.broadcast %154 : vector<1x768xf32> to vector<8x768xf32>
    %156 = arith.select %151, %153, %155 : vector<8x768xi1>, vector<8x768xf32>
    %157 = arith.addf %59, %144 : vector<8x768xf32>
    %158 = arith.addf %157, %156 : vector<8x768xf32>
    %cst_74 = arith.constant dense<0.000000e+00> : vector<8xf32>
    %159 = vector.multi_reduction <add>, %158, %cst_74 [1] : vector<8x768xf32> to vector<8xf32>
    %160 = vector.shape_cast %159 : vector<8xf32> to vector<8x1xf32>
    %cst_75 = arith.constant 7.680000e+02 : f32
    %161 = vector.broadcast %cst_75 : f32 to vector<8x1xf32>
    %162 = arith.divf %160, %161 : vector<8x1xf32>
    %163 = vector.broadcast %162 : vector<8x1xf32> to vector<8x768xf32>
    %164 = arith.subf %158, %163 : vector<8x768xf32>
    %165 = arith.mulf %164, %164 : vector<8x768xf32>
    %cst_76 = arith.constant dense<0.000000e+00> : vector<8xf32>
    %166 = vector.multi_reduction <add>, %165, %cst_76 [1] : vector<8x768xf32> to vector<8xf32>
    %167 = vector.shape_cast %166 : vector<8xf32> to vector<8x1xf32>
    %cst_77 = arith.constant 7.680000e+02 : f32
    %168 = vector.broadcast %cst_77 : f32 to vector<8x1xf32>
    %169 = arith.divf %167, %168 : vector<8x1xf32>
    %cst_78 = arith.constant 9.99999974E-6 : f32
    %170 = vector.broadcast %cst_78 : f32 to vector<8x1xf32>
    %171 = arith.addf %169, %170 : vector<8x1xf32>
    %172 = math.rsqrt %171 : vector<8x1xf32>
    %173 = vector.broadcast %172 : vector<8x1xf32> to vector<8x768xf32>
    %174 = arith.mulf %164, %173 : vector<8x768xf32>
    %c0_79 = arith.constant 0 : index
    %c0_80 = arith.constant 0 : index
    %175 = vector.load %arg5[%c0_79, %c0_80] : memref<1x768xf32, #tpu.memory_space<vmem>>, vector<1x768xf32>
    %176 = vector.broadcast %175 : vector<1x768xf32> to vector<8x768xf32>
    %177 = arith.mulf %174, %176 : vector<8x768xf32>
    %c0_81 = arith.constant 0 : index
    %c0_82 = arith.constant 0 : index
    %178 = vector.load %arg6[%c0_81, %c0_82] : memref<1x768xf32, #tpu.memory_space<vmem>>, vector<1x768xf32>
    %179 = vector.broadcast %178 : vector<1x768xf32> to vector<8x768xf32>
    %180 = arith.addf %177, %179 : vector<8x768xf32>
    %c0_83 = arith.constant 0 : index
    %c0_84 = arith.constant 0 : index
    %181 = vector.load %arg8[%c0_83, %c0_84] : memref<8x768xf32, #tpu.memory_space<vmem>>, vector<8x768xf32>
    tpu.vector_store %arg8[%c0_83, %c0_84], %180 {strides = array<i32>} : memref<8x768xf32, #tpu.memory_space<vmem>>, vector<8x768xf32>,
    return
  }
  func.func @transform_1(%arg0: i32, %arg1: memref<16xi32, #tpu.memory_space<smem>>) -> (i32, i32) {
    %c0_i32 = arith.constant 0 : i32
    %c0_i32_0 = arith.constant 0 : i32
    %c0_i32_1 = arith.constant 0 : i32
    return %c0_i32, %c0_i32_0 : i32, i32
  }
  func.func @transform_2(%arg0: i32, %arg1: memref<16xi32, #tpu.memory_space<smem>>) -> (i32, i32) {
    %c0_i32 = arith.constant 0 : i32
    %c0_i32_0 = arith.constant 0 : i32
    %c0_i32_1 = arith.constant 0 : i32
    return %c0_i32, %c0_i32_0 : i32, i32
  }
  func.func @transform_3(%arg0: i32, %arg1: memref<16xi32, #tpu.memory_space<smem>>) -> (i32, i32) {
    %c0_i32 = arith.constant 0 : i32
    %c0_i32_0 = arith.constant 0 : i32
    %c0_i32_1 = arith.constant 0 : i32
    return %c0_i32, %c0_i32_0 : i32, i32
  }
  func.func @transform_4(%arg0: i32, %arg1: memref<16xi32, #tpu.memory_space<smem>>) -> (i32, i32) {
    %c0_i32 = arith.constant 0 : i32
    %c0_i32_0 = arith.constant 0 : i32
    %c0_i32_1 = arith.constant 0 : i32
    return %c0_i32, %c0_i32_0 : i32, i32
  }
  func.func @transform_5(%arg0: i32, %arg1: memref<16xi32, #tpu.memory_space<smem>>) -> (i32, i32) {
    %c0_i32 = arith.constant 0 : i32
    %c0_i32_0 = arith.constant 0 : i32
    return %arg0, %c0_i32 : i32, i32
  }
  func.func @transform_6(%arg0: i32, %arg1: memref<16xi32, #tpu.memory_space<smem>>) -> (i32, i32) {
    %c0_i32 = arith.constant 0 : i32
    %c0_i32_0 = arith.constant 0 : i32
    return %arg0, %c0_i32 : i32, i32
  }
}

</mosaic_0001>

<llo_original>
// kernel: tpu_custom_call.1
$region0: #{tpu_custom_call.1}
  #allocation0 [shape = 'u32[]', space=smem, size = 0x4, offset = 0x4, fixed_abs, tag = 'smem constant byte address 0x4 - core index']
  #allocation1 [shape = 'u32[144,128]{1,0:T(1,128)}', space=vmem, size = 0x12000, scoped, tag = 'internal scratch']
  #allocation2 [shape = 'f32[4,8,768]{2,1,0:T(8,128)}', space=vmem, size = 0x18000, scoped, tag = 'scratch operand']
  #allocation3 [shape = 's32[32]{0}', space=sflag, size = 0x80, scoped, tag = 'scratch operand']
  #allocation4 [shape = 's32[1]{0}', space=sflag, size = 0x4, scoped, tag = 'scoped memory for tpu_custom_call.1']
  #allocation5 [shape = 'u8[512]{0}', space=smem, size = 0x200, scoped, tag = 'prefetched SMEM operand 0']
  #allocation15 [shape = 's32[]', space=sflag, size = 0x4, offset = 0, fixed_abs, tag = 'sflag constant byte address 0x0 - dummy sync flag']
  #allocation16 [shape = 's32[]', space=sflag, size = 0x4, offset = 0, fixed_abs, tag = 'sflag constant byte address 0x0 - dummy sync flag']
  #allocation17 [shape = 's32[]', space=sflag, size = 0x4, offset = 0, fixed_abs, tag = 'sflag constant byte address 0x0 - dummy sync flag']
  #allocation18 [shape = 's32[]', space=sflag, size = 0x4, offset = 0, fixed_abs, tag = 'sflag constant byte address 0x0 - dummy sync flag']
  #allocation19 [shape = 's32[]', space=sflag, size = 0x4, offset = 0, fixed_abs, tag = 'sflag constant byte address 0x0 - dummy sync flag']
  #allocation20 [shape = 's32[]', space=sflag, size = 0x4, offset = 0, fixed_abs, tag = 'sflag constant byte address 0x0 - dummy sync flag']
  #allocation21 [shape = 's32[]', space=sflag, size = 0x4, offset = 0, fixed_abs, tag = 'sflag constant byte address 0x0 - dummy sync flag']
  #allocation22 [shape = 's32[]', space=sflag, size = 0x4, offset = 0, fixed_abs, tag = 'sflag constant byte address 0x0 - dummy sync flag']
  #allocation23 [shape = 's32[]', space=sflag, size = 0x4, offset = 0, fixed_abs, tag = 'sflag constant byte address 0x0 - dummy sync flag']
  #allocation24 [shape = 's32[]', space=sflag, size = 0x4, offset = 0, fixed_abs, tag = 'sflag constant byte address 0x0 - dummy sync flag']
  #allocation25 [shape = 's32[]', space=sflag, size = 0x4, offset = 0, fixed_abs, tag = 'sflag constant byte address 0x0 - dummy sync flag']
  #allocation26 [shape = 's32[]', space=sflag, size = 0x4, offset = 0, fixed_abs, tag = 'sflag constant byte address 0x0 - dummy sync flag']
  #allocation27 [shape = 's32[]', space=sflag, size = 0x4, offset = 0, fixed_abs, tag = 'sflag constant byte address 0x0 - dummy sync flag']
  #allocation28 [shape = 's32[]', space=sflag, size = 0x4, offset = 0, fixed_abs, tag = 'sflag constant byte address 0x0 - dummy sync flag']
  #allocation29 [shape = 's32[]', space=sflag, size = 0x4, offset = 0, fixed_abs, tag = 'sflag constant byte address 0x0 - dummy sync flag']
  #allocation30 [shape = 's32[]', space=sflag, size = 0x4, offset = 0, fixed_abs, tag = 'sflag constant byte address 0x0 - dummy sync flag']
  #allocation31 [shape = 's32[]', space=sflag, size = 0x4, offset = 0, fixed_abs, tag = 'sflag constant byte address 0x0 - dummy sync flag']
  #allocation32 [shape = 's32[]', space=sflag, size = 0x4, offset = 0, fixed_abs, tag = 'sflag constant byte address 0x0 - dummy sync flag']
  #allocation33 [shape = 's32[]', space=sflag, size = 0x4, offset = 0, fixed_abs, tag = 'sflag constant byte address 0x0 - dummy sync flag']
  #allocation34 [shape = 's32[]', space=sflag, size = 0x4, offset = 0, fixed_abs, tag = 'sflag constant byte address 0x0 - dummy sync flag']
  #allocation35 [shape = 's32[]', space=sflag, size = 0x4, offset = 0, fixed_abs, tag = 'sflag constant byte address 0x0 - dummy sync flag']
  #allocation36 [shape = 's32[]', space=sflag, size = 0x4, offset = 0, fixed_abs, tag = 'sflag constant byte address 0x0 - dummy sync flag']
  #allocation37 [shape = 's32[]', space=sflag, size = 0x4, offset = 0, fixed_abs, tag = 'sflag constant byte address 0x0 - dummy sync flag']
  #allocation38 [shape = 's32[]', space=sflag, size = 0x4, offset = 0, fixed_abs, tag = 'sflag constant byte address 0x0 - dummy sync flag']
  %s0 = inlined_call_operand.hbm [shape: s32[16], index: 0, kind: input, shape index: {}]
  %s1 = inlined_call_operand.hbm [shape: f32[1000,768], index: 1, kind: input, shape index: {}]
  %s2 = inlined_call_operand.hbm [shape: f32[10,768], index: 2, kind: input, shape index: {}]
  %s3 = inlined_call_operand.hbm [shape: f32[2,768], index: 3, kind: input, shape index: {}]
  %s4 = inlined_call_operand.hbm [shape: f32[1,768], index: 4, kind: input, shape index: {}]
  %s5 = inlined_call_operand.hbm [shape: f32[1,768], index: 5, kind: input, shape index: {}]
  %s6 = inlined_call_operand.vmem [shape: s32[16,1], index: 6, kind: input, shape index: {}]
  %s7 = inlined_call_operand.hbm [shape: f32[16,768], index: 7, kind: output, shape index: {}]
  %s8 = sld [smem:[#allocation0]]
  $region77: #{tpu_custom_call.1} parent=0
    _
  %s10 = ssub.s32 1, %s8
  %s11 = scalar_select 0, %s10, %s8
  %13 = dma.hbm_to_smem %s0, 16, [#allocation5], [#allocation4]
  %14 = dma.done [#allocation4], 16
  %15 = sfence
  $region1: #{tpu_custom_call.1} parent=0
    #allocation6 [shape = 'u8[49152]{0}', space=vmem, size = 0xc000, scoped, tag = 'input window, operand 2, single buffered']
    #allocation7 [shape = 's32[2]{0}', space=sflag, size = 0x8, scoped, tag = 'scoped memory for tpu_custom_call.1']
    #allocation8 [shape = 's32[2]{0}', space=sflag, size = 0x8, scoped, tag = 'scoped memory for tpu_custom_call.1']
    #allocation9 [shape = 'u8[6144]{0}', space=vmem, size = 0x1800, scoped, tag = 'input window, operand 3, single buffered']
    #allocation10 [shape = 's32[1]{0}', space=sflag, size = 0x4, scoped, tag = 'scoped memory for tpu_custom_call.1']
    #allocation11 [shape = 'u8[3072]{0}', space=vmem, size = 0xc00, scoped, tag = 'input window, operand 4, single buffered']
    #allocation12 [shape = 'u8[3072]{0}', space=vmem, size = 0xc00, scoped, tag = 'input window, operand 5, single buffered']
    #allocation13 [shape = 's32[1]{0}', space=sflag, size = 0x4, scoped, tag = 'scoped memory for tpu_custom_call.1']
    #allocation14 [shape = 'u8[49152]{0}', space=vmem, size = 0xc000, scoped, tag = 'output window, operand 0']
    %16 = vsyncpa [#allocation7], 0
    %17 = vsyncpa [#allocation10], 0
    %18 = vsyncpa [#allocation13], 0
    %19 = vsyncpa [#allocation8], 0
    %s20 = scalar_lea.sflag [#allocation8], 1
    %21 = vsyncpa %s20, 0
    loop: start=0, step=1, limit=4
    $region2: #{tpu_custom_call.1} parent=1 // loop_pre_header
      _
    $region3: #{tpu_custom_call.1} parent=1 // loop_header
      %s23 = sphi 0, %s27
      %p24 = scmp.ge.s32.totalorder %s23, 4
      %s31 = sphi 0, %s31
      %s33 = sphi 0, %s31
      %s34 = sphi 0, %s33
      %s48 = sphi 0, %s34
      %s52 = sphi 0, %s52
      %s54 = sphi 0, %s52
      %s55 = sphi 0, %s54
      %s69 = sphi 0, %s55
      %s73 = sphi 0, %s73
      %s75 = sphi 0, %s73
      %s76 = sphi 0, %s75
      %s90 = sphi 0, %s76
      %s94 = sphi 0, %s94
      %s96 = sphi 0, %s94
      %s97 = sphi 0, %s96
      %s111 = sphi 0, %s97
      %s117 = sphi 0, %s119
      %s120 = sphi 0, %s117
      %s121 = sphi 0, %s120
      %s137 = sphi 0, %s121
      %s143 = sphi 0, %s145
      %s146 = sphi 0, %s143
      %s147 = sphi 0, %s146
      %s163 = sphi 0, %s147
    $region4: #{tpu_custom_call.1} parent=1 // loop_header_branch
      %26 = sbr.rel (%p24) target = $region8
    $region5: #{tpu_custom_call.1} parent=1 // loop_body
      %s28 = ssub.s32 %s23, 1
      %s29 = ssub.s32 %s23, 2
      %s30 = sadd.s32 %s23, 1
      %s32 = sadd.s32 %s31, 1
      %p35 = scmp.eq.s32.totalorder %s23, 1
      %p36 = scmp.ne.s32.totalorder %s31, %s33
      %p37 = scmp.eq.s32.totalorder %s23, 0
      %p38 = por %p36, %p37
      %p39 = scmp.ne.s32.totalorder %s31, %s33
      %p40 = scmp.eq.s32.totalorder %s28, 1
      %p41 = por %p39, %p40
      %p42 = scmp.ne.s32.totalorder %s33, %s34
      %p43 = scmp.eq.s32.totalorder %s28, 0
      %p44 = por %p42, %p43
      %p45 = scmp.ne.s32.totalorder %s33, %s34
      %p46 = scmp.eq.s32.totalorder %s29, 1
      %p47 = por %p45, %p46
      %p49 = scmp.ne.s32.totalorder %s34, %s48
      %p50 = scmp.eq.s32.totalorder %s29, 0
      %p51 = por %p49, %p50
      %s53 = sadd.s32 %s52, 1
      %p56 = scmp.eq.s32.totalorder %s23, 1
      %p57 = scmp.ne.s32.totalorder %s52, %s54
      %p58 = scmp.eq.s32.totalorder %s23, 0
      %p59 = por %p57, %p58
      %p60 = scmp.ne.s32.totalorder %s52, %s54
      %p61 = scmp.eq.s32.totalorder %s28, 1
      %p62 = por %p60, %p61
      %p63 = scmp.ne.s32.totalorder %s54, %s55
      %p64 = scmp.eq.s32.totalorder %s28, 0
      %p65 = por %p63, %p64
      %p66 = scmp.ne.s32.totalorder %s54, %s55
      %p67 = scmp.eq.s32.totalorder %s29, 1
      %p68 = por %p66, %p67
      %p70 = scmp.ne.s32.totalorder %s55, %s69
      %p71 = scmp.eq.s32.totalorder %s29, 0
      %p72 = por %p70, %p71
      %s74 = sadd.s32 %s73, 1
      %p77 = scmp.eq.s32.totalorder %s23, 1
      %p78 = scmp.ne.s32.totalorder %s73, %s75
      %p79 = scmp.eq.s32.totalorder %s23, 0
      %p80 = por %p78, %p79
      %p81 = scmp.ne.s32.totalorder %s73, %s75
      %p82 = scmp.eq.s32.totalorder %s28, 1
      %p83 = por %p81, %p82
      %p84 = scmp.ne.s32.totalorder %s75, %s76
      %p85 = scmp.eq.s32.totalorder %s28, 0
      %p86 = por %p84, %p85
      %p87 = scmp.ne.s32.totalorder %s75, %s76
      %p88 = scmp.eq.s32.totalorder %s29, 1
      %p89 = por %p87, %p88
      %p91 = scmp.ne.s32.totalorder %s76, %s90
      %p92 = scmp.eq.s32.totalorder %s29, 0
      %p93 = por %p91, %p92
      %s95 = sadd.s32 %s94, 1
      %p98 = scmp.eq.s32.totalorder %s23, 1
      %p99 = scmp.ne.s32.totalorder %s94, %s96
      %p100 = scmp.eq.s32.totalorder %s23, 0
      %p101 = por %p99, %p100
      %p102 = scmp.ne.s32.totalorder %s94, %s96
      %p103 = scmp.eq.s32.totalorder %s28, 1
      %p104 = por %p102, %p103
      %p105 = scmp.ne.s32.totalorder %s96, %s97
      %p106 = scmp.eq.s32.totalorder %s28, 0
      %p107 = por %p105, %p106
      %p108 = scmp.ne.s32.totalorder %s96, %s97
      %p109 = scmp.eq.s32.totalorder %s29, 1
      %p110 = por %p108, %p109
      %p112 = scmp.ne.s32.totalorder %s97, %s111
      %p113 = scmp.eq.s32.totalorder %s29, 0
      %p114 = por %p112, %p113
      %s115 = ssub.s32 %s23, %s30
      %p116 = scmp.eq.s32.totalorder %s115, 0
      %s118 = sadd.s32 %s117, 1
      %s119 = scalar_select %p116, %s117, %s118
      %p122 = pneg %p116
      %p123 = scmp.eq.s32.totalorder %s23, 1
      %p124 = por %p122, %p123
      %p125 = scmp.ne.s32.totalorder %s117, %s120
      %p126 = scmp.eq.s32.totalorder %s23, 0
      %p127 = por %p125, %p126
      %p128 = scmp.ne.s32.totalorder %s117, %s120
      %p129 = scmp.eq.s32.totalorder %s28, 1
      %p130 = por %p128, %p129
      %p131 = scmp.ne.s32.totalorder %s120, %s121
      %p132 = scmp.eq.s32.totalorder %s28, 0
      %p133 = por %p131, %p132
      %p134 = scmp.ne.s32.totalorder %s120, %s121
      %p135 = scmp.eq.s32.totalorder %s29, 1
      %p136 = por %p134, %p135
      %p138 = scmp.ne.s32.totalorder %s121, %s137
      %p139 = scmp.eq.s32.totalorder %s29, 0
      %p140 = por %p138, %p139
      %s141 = ssub.s32 %s23, %s30
      %p142 = scmp.eq.s32.totalorder %s141, 0
      %s144 = sadd.s32 %s143, 1
      %s145 = scalar_select %p142, %s143, %s144
      %p148 = pneg %p142
      %p149 = scmp.eq.s32.totalorder %s23, 1
      %p150 = por %p148, %p149
      %p151 = scmp.ne.s32.totalorder %s143, %s146
      %p152 = scmp.eq.s32.totalorder %s23, 0
      %p153 = por %p151, %p152
      %p154 = scmp.ne.s32.totalorder %s143, %s146
      %p155 = scmp.eq.s32.totalorder %s28, 1
      %p156 = por %p154, %p155
      %p157 = scmp.ne.s32.totalorder %s146, %s147
      %p158 = scmp.eq.s32.totalorder %s28, 0
      %p159 = por %p157, %p158
      %p160 = scmp.ne.s32.totalorder %s146, %s147
      %p161 = scmp.eq.s32.totalorder %s29, 1
      %p162 = por %p160, %p161
      %p164 = scmp.ne.s32.totalorder %s147, %s163
      %p165 = scmp.eq.s32.totalorder %s29, 0
      %p166 = por %p164, %p165
      %p167 = scmp.le.s32.totalorder 1, %s23
      %p168 = scmp.lt.s32.totalorder %s23, 3
      %p169 = pnand %p167, %p168
      %p170 = pneg %p169
      // Predicated region
      $region9: #{tpu_custom_call.1} parent=5 // pred_check
        _
      $region10: #{tpu_custom_call.1} parent=5 // pred_check_branch
        %172 = sbr.rel (%p169) target = $region12
      $region11: #{tpu_custom_call.1} parent=5 // pred_region
        %s173 = ssub.s32 %s23, 1
        // Predicated region
        $region13: #{tpu_custom_call.1} parent=11 // pred_check
          %p174 = pneg %p44
        $region14: #{tpu_custom_call.1} parent=11 // pred_check_branch
          %176 = sbr.rel (%p174) target = $region16
        $region15: #{tpu_custom_call.1} parent=11 // pred_region
          %s178 = ssub.s32 1536, 1536
          %179 = vsyncadd [#allocation7], %s178
          %s180 = sshll.u32 [#allocation6], 4
          %s181 = int_to_ptr.vmem [resolvable:$true] %s180
          %186 = dma.hbm_to_vmem [thread:$0]  %s2, 1536, %s181, [#allocation7], 768, 768, 48
        $region16: #{tpu_custom_call.1} parent=11 // pred_fallthru
          _
        // Predicated region
        $region17: #{tpu_custom_call.1} parent=11 // pred_check
          %p187 = pneg %p65
        $region18: #{tpu_custom_call.1} parent=11 // pred_check_branch
          %189 = sbr.rel (%p187) target = $region20
        $region19: #{tpu_custom_call.1} parent=11 // pred_region
          %s191 = ssub.s32 192, 192
          %192 = vsyncadd [#allocation10], %s191
          %s194 = sshll.u32 [#allocation9], 4
          %s195 = int_to_ptr.vmem [resolvable:$true] %s194
          %197 = dma.hbm_to_vmem [thread:$0]  %s3, 192, %s195, [#allocation10]
        $region20: #{tpu_custom_call.1} parent=11 // pred_fallthru
          _
        // Predicated region
        $region21: #{tpu_custom_call.1} parent=11 // pred_check
          %p198 = pneg %p86
        $region22: #{tpu_custom_call.1} parent=11 // pred_check_branch
          %200 = sbr.rel (%p198) target = $region24
        $region23: #{tpu_custom_call.1} parent=11 // pred_region
          %s202 = ssub.s32 96, 96
          %203 = vsyncadd [#allocation10], %s202
          %s205 = sshll.u32 [#allocation11], 4
          %s206 = int_to_ptr.vmem [resolvable:$true] %s205
          %208 = dma.hbm_to_vmem [thread:$0]  %s4, 96, %s206, [#allocation10]
        $region24: #{tpu_custom_call.1} parent=11 // pred_fallthru
          _
        // Predicated region
        $region25: #{tpu_custom_call.1} parent=11 // pred_check
          %p209 = pneg %p107
        $region26: #{tpu_custom_call.1} parent=11 // pred_check_branch
          %211 = sbr.rel (%p209) target = $region28
        $region27: #{tpu_custom_call.1} parent=11 // pred_region
          %s213 = ssub.s32 96, 96
          %214 = vsyncadd [#allocation13], %s213
          %s216 = sshll.u32 [#allocation12], 4
          %s217 = int_to_ptr.vmem [resolvable:$true] %s216
          %219 = dma.hbm_to_vmem [thread:$0]  %s5, 96, %s217, [#allocation13]
        $region28: #{tpu_custom_call.1} parent=11 // pred_fallthru
          _
      $region12: #{tpu_custom_call.1} parent=5 // pred_fallthru
        _
      %p220 = scmp.lt.s32.totalorder %s23, 2
      // Predicated region
      $region29: #{tpu_custom_call.1} parent=5 // pred_check
        %p221 = pneg %p220
      $region30: #{tpu_custom_call.1} parent=5 // pred_check_branch
        %223 = sbr.rel (%p221) target = $region32
      $region31: #{tpu_custom_call.1} parent=5 // pred_region
        // Predicated region
        $region33: #{tpu_custom_call.1} parent=31 // pred_check
          %p224 = pneg %p127
        $region34: #{tpu_custom_call.1} parent=31 // pred_check_branch
          %226 = sbr.rel (%p224) target = $region36
        $region35: #{tpu_custom_call.1} parent=31 // pred_region
          %p227 = scmp.lt.s32.totalorder %s23, 1
          %s228 = scalar_select %p227, %s23, 1
          %s229 = smul.addr %s228, 8
          %s230 = scalar_lea.vmem %s6, %s229
        $region36: #{tpu_custom_call.1} parent=31 // pred_fallthru
          _
      $region32: #{tpu_custom_call.1} parent=5 // pred_fallthru
        _
      %p231 = scmp.le.s32.totalorder 1, %s23
      %p232 = scmp.lt.s32.totalorder %s23, 3
      %p233 = pnand %p231, %p232
      %p234 = pneg %p233
      // Predicated region
      $region37: #{tpu_custom_call.1} parent=5 // pred_check
        _
      $region38: #{tpu_custom_call.1} parent=5 // pred_check_branch
        %236 = sbr.rel (%p233) target = $region40
      $region39: #{tpu_custom_call.1} parent=5 // pred_region
        %s237 = ssub.s32 %s23, 1
        // Predicated region
        $region41: #{tpu_custom_call.1} parent=39 // pred_check
          %p238 = pneg %p44
        $region42: #{tpu_custom_call.1} parent=39 // pred_check_branch
          %240 = sbr.rel (%p238) target = $region44
        $region43: #{tpu_custom_call.1} parent=39 // pred_region
          %241 = dma.done [#allocation7], 1536
        $region44: #{tpu_custom_call.1} parent=39 // pred_fallthru
          _
        // Predicated region
        $region45: #{tpu_custom_call.1} parent=39 // pred_check
          %p242 = pneg %p65
        $region46: #{tpu_custom_call.1} parent=39 // pred_check_branch
          %244 = sbr.rel (%p242) target = $region48
        $region47: #{tpu_custom_call.1} parent=39 // pred_region
          %245 = dma.done [#allocation10], 192
        $region48: #{tpu_custom_call.1} parent=39 // pred_fallthru
          _
        // Predicated region
        $region49: #{tpu_custom_call.1} parent=39 // pred_check
          %p246 = pneg %p86
        $region50: #{tpu_custom_call.1} parent=39 // pred_check_branch
          %248 = sbr.rel (%p246) target = $region52
        $region51: #{tpu_custom_call.1} parent=39 // pred_region
          %249 = dma.done [#allocation10], 96
        $region52: #{tpu_custom_call.1} parent=39 // pred_fallthru
          _
        // Predicated region
        $region53: #{tpu_custom_call.1} parent=39 // pred_check
          %p250 = pneg %p107
        $region54: #{tpu_custom_call.1} parent=39 // pred_check_branch
          %252 = sbr.rel (%p250) target = $region56
        $region55: #{tpu_custom_call.1} parent=39 // pred_region
          %253 = dma.done [#allocation13], 96
        $region56: #{tpu_custom_call.1} parent=39 // pred_fallthru
          _
        %p254 = pneg %p44
        %p255 = pneg %p41
        %p256 = pneg %p65
        %p257 = pneg %p62
        %p258 = pneg %p86
        %p259 = pneg %p83
        %p260 = pneg %p107
        %p261 = pneg %p104
        %p262 = scmp.lt.s32.totalorder %s28, 1
        %s263 = scalar_select %p262, %s28, 1
        %s264 = smul.addr %s263, 8
        %s265 = scalar_lea.vmem %s6, %s264
        %p266 = pneg %p133
        %p267 = pneg %p130
        %p268 = pneg %p159
        %p269 = pneg %p156
        %s270 = sand.u32 %s146, 1
        %s271 = scalar_lea.sflag [#allocation8], %s270
        %s272 = sand.u32 %s146, 1
        %s273 = smul.addr %s272, 48
        %s274 = scalar_lea.vmem [#allocation14], %s273
        %p275 = scmp.lt.s32.totalorder %s28, 1
        %s276 = scalar_select %p275, %s28, 1
        %s277 = smul.addr %s276, 8
        %s278 = scalar_lea.vmem %s6, %s277
        %p279 = scmp.eq.s32.totalorder %s28, 0
        // Predicated region
        $region57: #{tpu_custom_call.1} parent=39 // pred_check
          %p280 = pneg %p279
        $region58: #{tpu_custom_call.1} parent=39 // pred_check_branch
          %282 = sbr.rel (%p280) target = $region60
        $region59: #{tpu_custom_call.1} parent=39 // pred_region
          %s283 = sld [smem:[#allocation5]]
          %s284 = sshrl.u32 %s283, 3
          %s285 = sand.u32 %s283, 7
          %s286 = smul.u32 %s284, 48
          %s287 = sadd.s32 %s285, %s286
          %s288 = smul.addr %s287, 16
          %s289 = scalar_lea.hbm %s1, %s288
          %s291 = sshll.u32 [#allocation2], 4
          %s292 = int_to_ptr.vmem [resolvable:$true] %s291
          %294 = dma.hbm_to_vmem [thread:$0]  %s289, 96, %s292, [#allocation3], 128, 128, 1
          %s295 = sld [smem:[#allocation5 + $0x1]]
          %s296 = sshrl.u32 %s295, 3
          %s297 = sand.u32 %s295, 7
          %s298 = smul.u32 %s296, 48
          %s299 = sadd.s32 %s297, %s298
          %s300 = smul.addr %s299, 16
          %s301 = scalar_lea.hbm %s1, %s300
          %s302 = scalar_lea.vmem [#allocation2], 1
          %s303 = scalar_lea.sflag [#allocation3], 1
          %s305 = sshll.u32 %s302, 4
          %s306 = int_to_ptr.vmem [resolvable:$true] %s305
          %308 = dma.hbm_to_vmem [thread:$0]  %s301, 96, %s306, %s303, 128, 128, 1
          %s309 = sld [smem:[#allocation5 + $0x2]]
          %s310 = sshrl.u32 %s309, 3
          %s311 = sand.u32 %s309, 7
          %s312 = smul.u32 %s310, 48
          %s313 = sadd.s32 %s311, %s312
          %s314 = smul.addr %s313, 16
          %s315 = scalar_lea.hbm %s1, %s314
          %s316 = scalar_lea.vmem [#allocation2], 2
          %s317 = scalar_lea.sflag [#allocation3], 2
          %s319 = sshll.u32 %s316, 4
          %s320 = int_to_ptr.vmem [resolvable:$true] %s319
          %322 = dma.hbm_to_vmem [thread:$0]  %s315, 96, %s320, %s317, 128, 128, 1
          %s323 = sld [smem:[#allocation5 + $0x3]]
          %s324 = sshrl.u32 %s323, 3
          %s325 = sand.u32 %s323, 7
          %s326 = smul.u32 %s324, 48
          %s327 = sadd.s32 %s325, %s326
          %s328 = smul.addr %s327, 16
          %s329 = scalar_lea.hbm %s1, %s328
          %s330 = scalar_lea.vmem [#allocation2], 3
          %s331 = scalar_lea.sflag [#allocation3], 3
          %s333 = sshll.u32 %s330, 4
          %s334 = int_to_ptr.vmem [resolvable:$true] %s333
          %336 = dma.hbm_to_vmem [thread:$0]  %s329, 96, %s334, %s331, 128, 128, 1
          %s337 = sld [smem:[#allocation5 + $0x4]]
          %s338 = sshrl.u32 %s337, 3
          %s339 = sand.u32 %s337, 7
          %s340 = smul.u32 %s338, 48
          %s341 = sadd.s32 %s339, %s340
          %s342 = smul.addr %s341, 16
          %s343 = scalar_lea.hbm %s1, %s342
          %s344 = scalar_lea.vmem [#allocation2], 4
          %s345 = scalar_lea.sflag [#allocation3], 4
          %s347 = sshll.u32 %s344, 4
          %s348 = int_to_ptr.vmem [resolvable:$true] %s347
          %350 = dma.hbm_to_vmem [thread:$0]  %s343, 96, %s348, %s345, 128, 128, 1
          %s351 = sld [smem:[#allocation5 + $0x5]]
          %s352 = sshrl.u32 %s351, 3
          %s353 = sand.u32 %s351, 7
          %s354 = smul.u32 %s352, 48
          %s355 = sadd.s32 %s353, %s354
          %s356 = smul.addr %s355, 16
          %s357 = scalar_lea.hbm %s1, %s356
          %s358 = scalar_lea.vmem [#allocation2], 5
          %s359 = scalar_lea.sflag [#allocation3], 5
          %s361 = sshll.u32 %s358, 4
          %s362 = int_to_ptr.vmem [resolvable:$true] %s361
          %364 = dma.hbm_to_vmem [thread:$0]  %s357, 96, %s362, %s359, 128, 128, 1
          %s365 = sld [smem:[#allocation5 + $0x6]]
          %s366 = sshrl.u32 %s365, 3
          %s367 = sand.u32 %s365, 7
          %s368 = smul.u32 %s366, 48
          %s369 = sadd.s32 %s367, %s368
          %s370 = smul.addr %s369, 16
          %s371 = scalar_lea.hbm %s1, %s370
          %s372 = scalar_lea.vmem [#allocation2], 6
          %s373 = scalar_lea.sflag [#allocation3], 6
          %s375 = sshll.u32 %s372, 4
          %s376 = int_to_ptr.vmem [resolvable:$true] %s375
          %378 = dma.hbm_to_vmem [thread:$0]  %s371, 96, %s376, %s373, 128, 128, 1
          %s379 = sld [smem:[#allocation5 + $0x7]]
          %s380 = sshrl.u32 %s379, 3
          %s381 = sand.u32 %s379, 7
          %s382 = smul.u32 %s380, 48
          %s383 = sadd.s32 %s381, %s382
          %s384 = smul.addr %s383, 16
          %s385 = scalar_lea.hbm %s1, %s384
          %s386 = scalar_lea.vmem [#allocation2], 7
          %s387 = scalar_lea.sflag [#allocation3], 7
          %s389 = sshll.u32 %s386, 4
          %s390 = int_to_ptr.vmem [resolvable:$true] %s389
          %392 = dma.hbm_to_vmem [thread:$0]  %s385, 96, %s390, %s387, 128, 128, 1
          %s393 = sld [smem:[#allocation5 + $0x8]]
          %s394 = sshrl.u32 %s393, 3
          %s395 = sand.u32 %s393, 7
          %s396 = smul.u32 %s394, 48
          %s397 = sadd.s32 %s395, %s396
          %s398 = smul.addr %s397, 16
          %s399 = scalar_lea.hbm %s1, %s398
          %s400 = scalar_lea.vmem [#allocation2], 48
          %s401 = scalar_lea.sflag [#allocation3], 8
          %s403 = sshll.u32 %s400, 4
          %s404 = int_to_ptr.vmem [resolvable:$true] %s403
          %406 = dma.hbm_to_vmem [thread:$0]  %s399, 96, %s404, %s401, 128, 128, 1
          %s407 = sld [smem:[#allocation5 + $0x9]]
          %s408 = sshrl.u32 %s407, 3
          %s409 = sand.u32 %s407, 7
          %s410 = smul.u32 %s408, 48
          %s411 = sadd.s32 %s409, %s410
          %s412 = smul.addr %s411, 16
          %s413 = scalar_lea.hbm %s1, %s412
          %s414 = scalar_lea.vmem [#allocation2], 49
          %s415 = scalar_lea.sflag [#allocation3], 9
          %s417 = sshll.u32 %s414, 4
          %s418 = int_to_ptr.vmem [resolvable:$true] %s417
          %420 = dma.hbm_to_vmem [thread:$0]  %s413, 96, %s418, %s415, 128, 128, 1
          %s421 = sld [smem:[#allocation5 + $0xa]]
          %s422 = sshrl.u32 %s421, 3
          %s423 = sand.u32 %s421, 7
          %s424 = smul.u32 %s422, 48
          %s425 = sadd.s32 %s423, %s424
          %s426 = smul.addr %s425, 16
          %s427 = scalar_lea.hbm %s1, %s426
          %s428 = scalar_lea.vmem [#allocation2], 50
          %s429 = scalar_lea.sflag [#allocation3], 10
          %s431 = sshll.u32 %s428, 4
          %s432 = int_to_ptr.vmem [resolvable:$true] %s431
          %434 = dma.hbm_to_vmem [thread:$0]  %s427, 96, %s432, %s429, 128, 128, 1
          %s435 = sld [smem:[#allocation5 + $0xb]]
          %s436 = sshrl.u32 %s435, 3
          %s437 = sand.u32 %s435, 7
          %s438 = smul.u32 %s436, 48
          %s439 = sadd.s32 %s437, %s438
          %s440 = smul.addr %s439, 16
          %s441 = scalar_lea.hbm %s1, %s440
          %s442 = scalar_lea.vmem [#allocation2], 51
          %s443 = scalar_lea.sflag [#allocation3], 11
          %s445 = sshll.u32 %s442, 4
          %s446 = int_to_ptr.vmem [resolvable:$true] %s445
          %448 = dma.hbm_to_vmem [thread:$0]  %s441, 96, %s446, %s443, 128, 128, 1
          %s449 = sld [smem:[#allocation5 + $0xc]]
          %s450 = sshrl.u32 %s449, 3
          %s451 = sand.u32 %s449, 7
          %s452 = smul.u32 %s450, 48
          %s453 = sadd.s32 %s451, %s452
          %s454 = smul.addr %s453, 16
          %s455 = scalar_lea.hbm %s1, %s454
          %s456 = scalar_lea.vmem [#allocation2], 52
          %s457 = scalar_lea.sflag [#allocation3], 12
          %s459 = sshll.u32 %s456, 4
          %s460 = int_to_ptr.vmem [resolvable:$true] %s459
          %462 = dma.hbm_to_vmem [thread:$0]  %s455, 96, %s460, %s457, 128, 128, 1
          %s463 = sld [smem:[#allocation5 + $0xd]]
          %s464 = sshrl.u32 %s463, 3
          %s465 = sand.u32 %s463, 7
          %s466 = smul.u32 %s464, 48
          %s467 = sadd.s32 %s465, %s466
          %s468 = smul.addr %s467, 16
          %s469 = scalar_lea.hbm %s1, %s468
          %s470 = scalar_lea.vmem [#allocation2], 53
          %s471 = scalar_lea.sflag [#allocation3], 13
          %s473 = sshll.u32 %s470, 4
          %s474 = int_to_ptr.vmem [resolvable:$true] %s473
          %476 = dma.hbm_to_vmem [thread:$0]  %s469, 96, %s474, %s471, 128, 128, 1
          %s477 = sld [smem:[#allocation5 + $0xe]]
          %s478 = sshrl.u32 %s477, 3
          %s479 = sand.u32 %s477, 7
          %s480 = smul.u32 %s478, 48
          %s481 = sadd.s32 %s479, %s480
          %s482 = smul.addr %s481, 16
          %s483 = scalar_lea.hbm %s1, %s482
          %s484 = scalar_lea.vmem [#allocation2], 54
          %s485 = scalar_lea.sflag [#allocation3], 14
          %s487 = sshll.u32 %s484, 4
          %s488 = int_to_ptr.vmem [resolvable:$true] %s487
          %490 = dma.hbm_to_vmem [thread:$0]  %s483, 96, %s488, %s485, 128, 128, 1
          %s491 = sld [smem:[#allocation5 + $0xf]]
          %s492 = sshrl.u32 %s491, 3
          %s493 = sand.u32 %s491, 7
          %s494 = smul.u32 %s492, 48
          %s495 = sadd.s32 %s493, %s494
          %s496 = smul.addr %s495, 16
          %s497 = scalar_lea.hbm %s1, %s496
          %s498 = scalar_lea.vmem [#allocation2], 55
          %s499 = scalar_lea.sflag [#allocation3], 15
          %s501 = sshll.u32 %s498, 4
          %s502 = int_to_ptr.vmem [resolvable:$true] %s501
          %504 = dma.hbm_to_vmem [thread:$0]  %s497, 96, %s502, %s499, 128, 128, 1
        $region60: #{tpu_custom_call.1} parent=39 // pred_fallthru
          _
        %s505 = sadd.s32 %s28, 3
        %p506 = scmp.lt.s32.totalorder %s505, 2
        // Predicated region
        $region61: #{tpu_custom_call.1} parent=39 // pred_check
          %p507 = pneg %p506
        $region62: #{tpu_custom_call.1} parent=39 // pred_check_branch
          %509 = sbr.rel (%p507) target = $region64
        $region63: #{tpu_custom_call.1} parent=39 // pred_region
          %p510 = scmp.lt.s32.totalorder %s505, 0
          %s511 = ssub.s32 0, %s505
          %s512 = scalar_select %p510, %s511, %s505
          %s513 = sand.u32 %s512, 3
          %s514 = ssub.s32 0, %s513
          %s515 = scalar_select %p510, %s514, %s513
          %p516 = scmp.ne.s32.totalorder %s515, 0
          %p517 = scmp.lt.s32.totalorder %s515, 0
          %p518 = pnand %p517, %p516
          %p519 = pneg %p518
          %s520 = sadd.s32 %s515, 4
          %s521 = scalar_select %p519, %s520, %s515
          %s522 = smul.u32 %s505, 8
          %s523 = sld [smem:[#allocation5 + %s522]]
          %s524 = sshrl.u32 %s523, 3
          %s525 = sand.u32 %s523, 7
          %s526 = smul.u32 %s524, 48
          %s527 = sadd.s32 %s525, %s526
          %s528 = smul.addr %s527, 16
          %s529 = scalar_lea.hbm %s1, %s528
          %s530 = smul.u32 %s521, 48
          %s531 = scalar_lea.vmem [#allocation2], %s530
          %s532 = smul.u32 %s521, 8
          %s533 = scalar_lea.sflag [#allocation3], %s532
          %s535 = sshll.u32 %s531, 4
          %s536 = int_to_ptr.vmem [resolvable:$true] %s535
          %538 = dma.hbm_to_vmem [thread:$0]  %s529, 96, %s536, %s533, 128, 128, 1
          %s539 = sadd.s32 %s522, 1
          %s540 = sld [smem:[#allocation5 + %s539]]
          %s541 = sshrl.u32 %s540, 3
          %s542 = sand.u32 %s540, 7
          %s543 = smul.u32 %s541, 48
          %s544 = sadd.s32 %s542, %s543
          %s545 = smul.addr %s544, 16
          %s546 = scalar_lea.hbm %s1, %s545
          %s547 = sadd.s32 1, %s530
          %s548 = scalar_lea.vmem [#allocation2], %s547
          %s549 = sadd.s32 1, %s532
          %s550 = scalar_lea.sflag [#allocation3], %s549
          %s552 = sshll.u32 %s548, 4
          %s553 = int_to_ptr.vmem [resolvable:$true] %s552
          %555 = dma.hbm_to_vmem [thread:$0]  %s546, 96, %s553, %s550, 128, 128, 1
          %s556 = sadd.s32 %s522, 2
          %s557 = sld [smem:[#allocation5 + %s556]]
          %s558 = sshrl.u32 %s557, 3
          %s559 = sand.u32 %s557, 7
          %s560 = smul.u32 %s558, 48
          %s561 = sadd.s32 %s559, %s560
          %s562 = smul.addr %s561, 16
          %s563 = scalar_lea.hbm %s1, %s562
          %s564 = sadd.s32 2, %s530
          %s565 = scalar_lea.vmem [#allocation2], %s564
          %s566 = sadd.s32 2, %s532
          %s567 = scalar_lea.sflag [#allocation3], %s566
          %s569 = sshll.u32 %s565, 4
          %s570 = int_to_ptr.vmem [resolvable:$true] %s569
          %572 = dma.hbm_to_vmem [thread:$0]  %s563, 96, %s570, %s567, 128, 128, 1
          %s573 = sadd.s32 %s522, 3
          %s574 = sld [smem:[#allocation5 + %s573]]
          %s575 = sshrl.u32 %s574, 3
          %s576 = sand.u32 %s574, 7
          %s577 = smul.u32 %s575, 48
          %s578 = sadd.s32 %s576, %s577
          %s579 = smul.addr %s578, 16
          %s580 = scalar_lea.hbm %s1, %s579
          %s581 = sadd.s32 3, %s530
          %s582 = scalar_lea.vmem [#allocation2], %s581
          %s583 = sadd.s32 3, %s532
          %s584 = scalar_lea.sflag [#allocation3], %s583
          %s586 = sshll.u32 %s582, 4
          %s587 = int_to_ptr.vmem [resolvable:$true] %s586
          %589 = dma.hbm_to_vmem [thread:$0]  %s580, 96, %s587, %s584, 128, 128, 1
          %s590 = sadd.s32 %s522, 4
          %s591 = sld [smem:[#allocation5 + %s590]]
          %s592 = sshrl.u32 %s591, 3
          %s593 = sand.u32 %s591, 7
          %s594 = smul.u32 %s592, 48
          %s595 = sadd.s32 %s593, %s594
          %s596 = smul.addr %s595, 16
          %s597 = scalar_lea.hbm %s1, %s596
          %s598 = sadd.s32 4, %s530
          %s599 = scalar_lea.vmem [#allocation2], %s598
          %s600 = sadd.s32 4, %s532
          %s601 = scalar_lea.sflag [#allocation3], %s600
          %s603 = sshll.u32 %s599, 4
          %s604 = int_to_ptr.vmem [resolvable:$true] %s603
          %606 = dma.hbm_to_vmem [thread:$0]  %s597, 96, %s604, %s601, 128, 128, 1
          %s607 = sadd.s32 %s522, 5
          %s608 = sld [smem:[#allocation5 + %s607]]
          %s609 = sshrl.u32 %s608, 3
          %s610 = sand.u32 %s608, 7
          %s611 = smul.u32 %s609, 48
          %s612 = sadd.s32 %s610, %s611
          %s613 = smul.addr %s612, 16
          %s614 = scalar_lea.hbm %s1, %s613
          %s615 = sadd.s32 5, %s530
          %s616 = scalar_lea.vmem [#allocation2], %s615
          %s617 = sadd.s32 5, %s532
          %s618 = scalar_lea.sflag [#allocation3], %s617
          %s620 = sshll.u32 %s616, 4
          %s621 = int_to_ptr.vmem [resolvable:$true] %s620
          %623 = dma.hbm_to_vmem [thread:$0]  %s614, 96, %s621, %s618, 128, 128, 1
          %s624 = sadd.s32 %s522, 6
          %s625 = sld [smem:[#allocation5 + %s624]]
          %s626 = sshrl.u32 %s625, 3
          %s627 = sand.u32 %s625, 7
          %s628 = smul.u32 %s626, 48
          %s629 = sadd.s32 %s627, %s628
          %s630 = smul.addr %s629, 16
          %s631 = scalar_lea.hbm %s1, %s630
          %s632 = sadd.s32 6, %s530
          %s633 = scalar_lea.vmem [#allocation2], %s632
          %s634 = sadd.s32 6, %s532
          %s635 = scalar_lea.sflag [#allocation3], %s634
          %s637 = sshll.u32 %s633, 4
          %s638 = int_to_ptr.vmem [resolvable:$true] %s637
          %640 = dma.hbm_to_vmem [thread:$0]  %s631, 96, %s638, %s635, 128, 128, 1
          %s641 = sadd.s32 %s522, 7
          %s642 = sld [smem:[#allocation5 + %s641]]
          %s643 = sshrl.u32 %s642, 3
          %s644 = sand.u32 %s642, 7
          %s645 = smul.u32 %s643, 48
          %s646 = sadd.s32 %s644, %s645
          %s647 = smul.addr %s646, 16
          %s648 = scalar_lea.hbm %s1, %s647
          %s649 = sadd.s32 7, %s530
          %s650 = scalar_lea.vmem [#allocation2], %s649
          %s651 = sadd.s32 7, %s532
          %s652 = scalar_lea.sflag [#allocation3], %s651
          %s654 = sshll.u32 %s650, 4
          %s655 = int_to_ptr.vmem [resolvable:$true] %s654
          %657 = dma.hbm_to_vmem [thread:$0]  %s648, 96, %s655, %s652, 128, 128, 1
        $region64: #{tpu_custom_call.1} parent=39 // pred_fallthru
          _
        %p658 = scmp.lt.s32.totalorder %s28, 0
        %s659 = ssub.s32 0, %s28
        %s660 = scalar_select %p658, %s659, %s28
        %s661 = sand.u32 %s660, 3
        %s662 = ssub.s32 0, %s661
        %s663 = scalar_select %p658, %s662, %s661
        %p664 = scmp.ne.s32.totalorder %s663, 0
        %p665 = scmp.lt.s32.totalorder %s663, 0
        %p666 = pnand %p665, %p664
        %p667 = pneg %p666
        %s668 = sadd.s32 %s663, 4
        %s669 = scalar_select %p667, %s668, %s663
        %s670 = smul.u32 %s669, 8
        %s671 = scalar_lea.sflag [#allocation3], %s670
        %s672 = smul.u32 1, 6
        %s673 = sshll.u32 %s672, 4
        %674 = dma.done %s671, %s673
        %s675 = sadd.s32 1, %s670
        %s676 = scalar_lea.sflag [#allocation3], %s675
        %s677 = sshll.u32 %s672, 4
        %678 = dma.done %s676, %s677
        %s679 = sadd.s32 2, %s670
        %s680 = scalar_lea.sflag [#allocation3], %s679
        %s681 = sshll.u32 %s672, 4
        %682 = dma.done %s680, %s681
        %s683 = sadd.s32 3, %s670
        %s684 = scalar_lea.sflag [#allocation3], %s683
        %s685 = sshll.u32 %s672, 4
        %686 = dma.done %s684, %s685
        %s687 = sadd.s32 4, %s670
        %s688 = scalar_lea.sflag [#allocation3], %s687
        %s689 = sshll.u32 %s672, 4
        %690 = dma.done %s688, %s689
        %s691 = sadd.s32 5, %s670
        %s692 = scalar_lea.sflag [#allocation3], %s691
        %s693 = sshll.u32 %s672, 4
        %694 = dma.done %s692, %s693
        %s695 = sadd.s32 6, %s670
        %s696 = scalar_lea.sflag [#allocation3], %s695
        %s697 = sshll.u32 %s672, 4
        %698 = dma.done %s696, %s697
        %s699 = sadd.s32 7, %s670
        %s700 = scalar_lea.sflag [#allocation3], %s699
        %s701 = sshll.u32 %s672, 4
        %702 = dma.done %s700, %s701
        %s703 = smul.u32 %s669, 6
        %s704 = smul.addr %s703, 8
        %s705 = scalar_lea.vmem [#allocation2], %s704
        %v706 = vld [vmem:[%s705] sm:$0xff]
        %v707 = vld [vmem:[%s705 + $0x8] sm:$0xff]
        %v708 = vld [vmem:[%s705 + $0x10] sm:$0xff]
        %v709 = vld [vmem:[%s705 + $0x18] sm:$0xff]
        %v710 = vld [vmem:[%s705 + $0x20] sm:$0xff]
        %v711 = vld [vmem:[%s705 + $0x28] sm:$0xff]
        %s712 = smul.u32 %s28, 8
        %v713 = vlaneseq
        %v714 = vshrl.u32 %v713, 7
        %v715 = vstv %s712
        %v716 = vadd.s32 %v715, %v714
        %vm717 = vcmp.lt.s32.totalorder %v716, 0
        %v718 = vsub.s32 0, %v716
        %v719 = vsel %vm717, %v718, %v716
        %v720 = vshrl.u32 %v719, 3
        %v721 = vand.u32 %v719, 7
        %v722 = vsub.s32 0, %v721
        %v723 = vsel %vm717, %v722, %v721
        %vm724 = vcmp.ne.s32.totalorder %v723, 0
        %vm725 = vcmp.lt.s32.totalorder %v723, 0
        %vm726 = vmand %vm725, %vm724
        %v727 = vadd.s32 %v723, 8
        %v728 = vsel %vm726, %v727, %v723
        %vm729 = vcmp.eq.s32.totalorder %v728, 0
        %v730 = vld [vmem:[#allocation6] ss:$8 sm:$0xf]
        %v731 = vld [vmem:[#allocation6] ss:$8 sm:$0x30]
        %v732 = vor.u32 %v730, %v731
        %v733 = vsel %vm729, 1, 0
        %vm734 = vcmp.eq.s32.totalorder %v733, 1
        %v736 = vlaneseq
        %v737 = vshrl.u32 %v736, 7
        %v738 = vsub.s32 0, %v737
        %v739 = vrot.slane %v732, %v738
        %v740 = vlaneseq
        %v741 = vshrl.u32 %v740, 7
        %v742 = vsub.s32 1, %v741
        %v743 = vrot.slane %v732, %v742
        %v744 = vlaneseq
        %v745 = vshrl.u32 %v744, 7
        %v746 = vsub.s32 2, %v745
        %v747 = vrot.slane %v732, %v746
        %v748 = vlaneseq
        %v749 = vshrl.u32 %v748, 7
        %v750 = vsub.s32 3, %v749
        %v751 = vrot.slane %v732, %v750
        %v752 = vlaneseq
        %v753 = vshrl.u32 %v752, 7
        %v754 = vsub.s32 4, %v753
        %v755 = vrot.slane %v732, %v754
        %v756 = vlaneseq
        %v757 = vshrl.u32 %v756, 7
        %v758 = vsub.s32 5, %v757
        %v759 = vrot.slane %v732, %v758
        %v766 = vsel %vm734, %v739, 0.0
        %v767 = vsel %vm734, %v743, 0.0
        %v768 = vsel %vm734, %v747, 0.0
        %v769 = vsel %vm734, %v751, 0.0
        %v770 = vsel %vm734, %v755, 0.0
        %v771 = vsel %vm734, %v759, 0.0
        %vm772 = vcmp.eq.s32.totalorder %v728, 1
        %s773 = scalar_lea.vmem [#allocation6], 1
        %v774 = vld [vmem:[%s773] ss:$8 sm:$0xf]
        %v775 = vld [vmem:[%s773] ss:$8 sm:$0x30]
        %v776 = vor.u32 %v774, %v775
        %v777 = vsel %vm772, 1, 0
        %vm778 = vcmp.eq.s32.totalorder %v777, 1
        %v780 = vlaneseq
        %v781 = vshrl.u32 %v780, 7
        %v782 = vsub.s32 0, %v781
        %v783 = vrot.slane %v776, %v782
        %v784 = vlaneseq
        %v785 = vshrl.u32 %v784, 7
        %v786 = vsub.s32 1, %v785
        %v787 = vrot.slane %v776, %v786
        %v788 = vlaneseq
        %v789 = vshrl.u32 %v788, 7
        %v790 = vsub.s32 2, %v789
        %v791 = vrot.slane %v776, %v790
        %v792 = vlaneseq
        %v793 = vshrl.u32 %v792, 7
        %v794 = vsub.s32 3, %v793
        %v795 = vrot.slane %v776, %v794
        %v796 = vlaneseq
        %v797 = vshrl.u32 %v796, 7
        %v798 = vsub.s32 4, %v797
        %v799 = vrot.slane %v776, %v798
        %v800 = vlaneseq
        %v801 = vshrl.u32 %v800, 7
        %v802 = vsub.s32 5, %v801
        %v803 = vrot.slane %v776, %v802
        %v810 = vsel %vm778, %v783, %v766
        %v811 = vsel %vm778, %v787, %v767
        %v812 = vsel %vm778, %v791, %v768
        %v813 = vsel %vm778, %v795, %v769
        %v814 = vsel %vm778, %v799, %v770
        %v815 = vsel %vm778, %v803, %v771
        %vm816 = vcmp.eq.s32.totalorder %v728, 2
        %s817 = scalar_lea.vmem [#allocation6], 2
        %v818 = vld [vmem:[%s817] ss:$8 sm:$0xf]
        %v819 = vld [vmem:[%s817] ss:$8 sm:$0x30]
        %v820 = vor.u32 %v818, %v819
        %v821 = vsel %vm816, 1, 0
        %vm822 = vcmp.eq.s32.totalorder %v821, 1
        %v824 = vlaneseq
        %v825 = vshrl.u32 %v824, 7
        %v826 = vsub.s32 0, %v825
        %v827 = vrot.slane %v820, %v826
        %v828 = vlaneseq
        %v829 = vshrl.u32 %v828, 7
        %v830 = vsub.s32 1, %v829
        %v831 = vrot.slane %v820, %v830
        %v832 = vlaneseq
        %v833 = vshrl.u32 %v832, 7
        %v834 = vsub.s32 2, %v833
        %v835 = vrot.slane %v820, %v834
        %v836 = vlaneseq
        %v837 = vshrl.u32 %v836, 7
        %v838 = vsub.s32 3, %v837
        %v839 = vrot.slane %v820, %v838
        %v840 = vlaneseq
        %v841 = vshrl.u32 %v840, 7
        %v842 = vsub.s32 4, %v841
        %v843 = vrot.slane %v820, %v842
        %v844 = vlaneseq
        %v845 = vshrl.u32 %v844, 7
        %v846 = vsub.s32 5, %v845
        %v847 = vrot.slane %v820, %v846
        %v854 = vsel %vm822, %v827, %v810
        %v855 = vsel %vm822, %v831, %v811
        %v856 = vsel %vm822, %v835, %v812
        %v857 = vsel %vm822, %v839, %v813
        %v858 = vsel %vm822, %v843, %v814
        %v859 = vsel %vm822, %v847, %v815
        %vm860 = vcmp.eq.s32.totalorder %v728, 3
        %s861 = scalar_lea.vmem [#allocation6], 3
        %v862 = vld [vmem:[%s861] ss:$8 sm:$0xf]
        %v863 = vld [vmem:[%s861] ss:$8 sm:$0x30]
        %v864 = vor.u32 %v862, %v863
        %v865 = vsel %vm860, 1, 0
        %vm866 = vcmp.eq.s32.totalorder %v865, 1
        %v868 = vlaneseq
        %v869 = vshrl.u32 %v868, 7
        %v870 = vsub.s32 0, %v869
        %v871 = vrot.slane %v864, %v870
        %v872 = vlaneseq
        %v873 = vshrl.u32 %v872, 7
        %v874 = vsub.s32 1, %v873
        %v875 = vrot.slane %v864, %v874
        %v876 = vlaneseq
        %v877 = vshrl.u32 %v876, 7
        %v878 = vsub.s32 2, %v877
        %v879 = vrot.slane %v864, %v878
        %v880 = vlaneseq
        %v881 = vshrl.u32 %v880, 7
        %v882 = vsub.s32 3, %v881
        %v883 = vrot.slane %v864, %v882
        %v884 = vlaneseq
        %v885 = vshrl.u32 %v884, 7
        %v886 = vsub.s32 4, %v885
        %v887 = vrot.slane %v864, %v886
        %v888 = vlaneseq
        %v889 = vshrl.u32 %v888, 7
        %v890 = vsub.s32 5, %v889
        %v891 = vrot.slane %v864, %v890
        %v898 = vsel %vm866, %v871, %v854
        %v899 = vsel %vm866, %v875, %v855
        %v900 = vsel %vm866, %v879, %v856
        %v901 = vsel %vm866, %v883, %v857
        %v902 = vsel %vm866, %v887, %v858
        %v903 = vsel %vm866, %v891, %v859
        %vm904 = vcmp.eq.s32.totalorder %v728, 4
        %s905 = scalar_lea.vmem [#allocation6], 4
        %v906 = vld [vmem:[%s905] ss:$8 sm:$0xf]
        %v907 = vld [vmem:[%s905] ss:$8 sm:$0x30]
        %v908 = vor.u32 %v906, %v907
        %v909 = vsel %vm904, 1, 0
        %vm910 = vcmp.eq.s32.totalorder %v909, 1
        %v912 = vlaneseq
        %v913 = vshrl.u32 %v912, 7
        %v914 = vsub.s32 0, %v913
        %v915 = vrot.slane %v908, %v914
        %v916 = vlaneseq
        %v917 = vshrl.u32 %v916, 7
        %v918 = vsub.s32 1, %v917
        %v919 = vrot.slane %v908, %v918
        %v920 = vlaneseq
        %v921 = vshrl.u32 %v920, 7
        %v922 = vsub.s32 2, %v921
        %v923 = vrot.slane %v908, %v922
        %v924 = vlaneseq
        %v925 = vshrl.u32 %v924, 7
        %v926 = vsub.s32 3, %v925
        %v927 = vrot.slane %v908, %v926
        %v928 = vlaneseq
        %v929 = vshrl.u32 %v928, 7
        %v930 = vsub.s32 4, %v929
        %v931 = vrot.slane %v908, %v930
        %v932 = vlaneseq
        %v933 = vshrl.u32 %v932, 7
        %v934 = vsub.s32 5, %v933
        %v935 = vrot.slane %v908, %v934
        %v942 = vsel %vm910, %v915, %v898
        %v943 = vsel %vm910, %v919, %v899
        %v944 = vsel %vm910, %v923, %v900
        %v945 = vsel %vm910, %v927, %v901
        %v946 = vsel %vm910, %v931, %v902
        %v947 = vsel %vm910, %v935, %v903
        %vm948 = vcmp.eq.s32.totalorder %v728, 5
        %s949 = scalar_lea.vmem [#allocation6], 5
        %v950 = vld [vmem:[%s949] ss:$8 sm:$0xf]
        %v951 = vld [vmem:[%s949] ss:$8 sm:$0x30]
        %v952 = vor.u32 %v950, %v951
        %v953 = vsel %vm948, 1, 0
        %vm954 = vcmp.eq.s32.totalorder %v953, 1
        %v956 = vlaneseq
        %v957 = vshrl.u32 %v956, 7
        %v958 = vsub.s32 0, %v957
        %v959 = vrot.slane %v952, %v958
        %v960 = vlaneseq
        %v961 = vshrl.u32 %v960, 7
        %v962 = vsub.s32 1, %v961
        %v963 = vrot.slane %v952, %v962
        %v964 = vlaneseq
        %v965 = vshrl.u32 %v964, 7
        %v966 = vsub.s32 2, %v965
        %v967 = vrot.slane %v952, %v966
        %v968 = vlaneseq
        %v969 = vshrl.u32 %v968, 7
        %v970 = vsub.s32 3, %v969
        %v971 = vrot.slane %v952, %v970
        %v972 = vlaneseq
        %v973 = vshrl.u32 %v972, 7
        %v974 = vsub.s32 4, %v973
        %v975 = vrot.slane %v952, %v974
        %v976 = vlaneseq
        %v977 = vshrl.u32 %v976, 7
        %v978 = vsub.s32 5, %v977
        %v979 = vrot.slane %v952, %v978
        %v986 = vsel %vm954, %v959, %v942
        %v987 = vsel %vm954, %v963, %v943
        %v988 = vsel %vm954, %v967, %v944
        %v989 = vsel %vm954, %v971, %v945
        %v990 = vsel %vm954, %v975, %v946
        %v991 = vsel %vm954, %v979, %v947
        %vm992 = vcmp.eq.s32.totalorder %v728, 6
        %s993 = scalar_lea.vmem [#allocation6], 6
        %v994 = vld [vmem:[%s993] ss:$8 sm:$0xf]
        %v995 = vld [vmem:[%s993] ss:$8 sm:$0x30]
        %v996 = vor.u32 %v994, %v995
        %v997 = vsel %vm992, 1, 0
        %vm998 = vcmp.eq.s32.totalorder %v997, 1
        %v1000 = vlaneseq
        %v1001 = vshrl.u32 %v1000, 7
        %v1002 = vsub.s32 0, %v1001
        %v1003 = vrot.slane %v996, %v1002
        %v1004 = vlaneseq
        %v1005 = vshrl.u32 %v1004, 7
        %v1006 = vsub.s32 1, %v1005
        %v1007 = vrot.slane %v996, %v1006
        %v1008 = vlaneseq
        %v1009 = vshrl.u32 %v1008, 7
        %v1010 = vsub.s32 2, %v1009
        %v1011 = vrot.slane %v996, %v1010
        %v1012 = vlaneseq
        %v1013 = vshrl.u32 %v1012, 7
        %v1014 = vsub.s32 3, %v1013
        %v1015 = vrot.slane %v996, %v1014
        %v1016 = vlaneseq
        %v1017 = vshrl.u32 %v1016, 7
        %v1018 = vsub.s32 4, %v1017
        %v1019 = vrot.slane %v996, %v1018
        %v1020 = vlaneseq
        %v1021 = vshrl.u32 %v1020, 7
        %v1022 = vsub.s32 5, %v1021
        %v1023 = vrot.slane %v996, %v1022
        %v1030 = vsel %vm998, %v1003, %v986
        %v1031 = vsel %vm998, %v1007, %v987
        %v1032 = vsel %vm998, %v1011, %v988
        %v1033 = vsel %vm998, %v1015, %v989
        %v1034 = vsel %vm998, %v1019, %v990
        %v1035 = vsel %vm998, %v1023, %v991
        %vm1036 = vcmp.eq.s32.totalorder %v728, 7
        %s1037 = scalar_lea.vmem [#allocation6], 7
        %v1038 = vld [vmem:[%s1037] ss:$8 sm:$0xf]
        %v1039 = vld [vmem:[%s1037] ss:$8 sm:$0x30]
        %v1040 = vor.u32 %v1038, %v1039
        %v1041 = vsel %vm1036, 1, 0
        %vm1042 = vcmp.eq.s32.totalorder %v1041, 1
        %v1044 = vlaneseq
        %v1045 = vshrl.u32 %v1044, 7
        %v1046 = vsub.s32 0, %v1045
        %v1047 = vrot.slane %v1040, %v1046
        %v1048 = vlaneseq
        %v1049 = vshrl.u32 %v1048, 7
        %v1050 = vsub.s32 1, %v1049
        %v1051 = vrot.slane %v1040, %v1050
        %v1052 = vlaneseq
        %v1053 = vshrl.u32 %v1052, 7
        %v1054 = vsub.s32 2, %v1053
        %v1055 = vrot.slane %v1040, %v1054
        %v1056 = vlaneseq
        %v1057 = vshrl.u32 %v1056, 7
        %v1058 = vsub.s32 3, %v1057
        %v1059 = vrot.slane %v1040, %v1058
        %v1060 = vlaneseq
        %v1061 = vshrl.u32 %v1060, 7
        %v1062 = vsub.s32 4, %v1061
        %v1063 = vrot.slane %v1040, %v1062
        %v1064 = vlaneseq
        %v1065 = vshrl.u32 %v1064, 7
        %v1066 = vsub.s32 5, %v1065
        %v1067 = vrot.slane %v1040, %v1066
        %v1074 = vsel %vm1042, %v1047, %v1030
        %v1075 = vsel %vm1042, %v1051, %v1031
        %v1076 = vsel %vm1042, %v1055, %v1032
        %v1077 = vsel %vm1042, %v1059, %v1033
        %v1078 = vsel %vm1042, %v1063, %v1034
        %v1079 = vsel %vm1042, %v1067, %v1035
        %v1080 = vld [vmem:[%s278] sm:$0xff]
        %vm1081 = vcmp.eq.s32.totalorder %v1080, 0
        %v1082 = vld [vmem:[#allocation9] ss:$2 sm:$0x3f]
        %s1083 = scalar_lea.vmem [#allocation9], 1
        %v1084 = vld [vmem:[%s1083] ss:$2 sm:$0x3f]
        %v1085 = vsel %vm1081, 1, 0
        %1086 = vset.pattern.permute.xlu0 0
        %1087 = vperm.xlu0 %1086, %v1085
        %v1088 = vpop.permute.xlu0 %1087
        %vm1089 = vcmp.eq.s32.totalorder %v1088, 1
        %v1091 = vlaneseq
        %v1092 = vshrl.u32 %v1091, 7
        %v1093 = vsub.s32 0, %v1092
        %v1094 = vrot.slane %v1082, %v1093
        %v1095 = vlaneseq
        %v1096 = vshrl.u32 %v1095, 7
        %v1097 = vsub.s32 1, %v1096
        %v1098 = vrot.slane %v1082, %v1097
        %v1099 = vlaneseq
        %v1100 = vshrl.u32 %v1099, 7
        %v1101 = vsub.s32 2, %v1100
        %v1102 = vrot.slane %v1082, %v1101
        %v1103 = vlaneseq
        %v1104 = vshrl.u32 %v1103, 7
        %v1105 = vsub.s32 3, %v1104
        %v1106 = vrot.slane %v1082, %v1105
        %v1107 = vlaneseq
        %v1108 = vshrl.u32 %v1107, 7
        %v1109 = vsub.s32 4, %v1108
        %v1110 = vrot.slane %v1082, %v1109
        %v1111 = vlaneseq
        %v1112 = vshrl.u32 %v1111, 7
        %v1113 = vsub.s32 5, %v1112
        %v1114 = vrot.slane %v1082, %v1113
        %v1122 = vlaneseq
        %v1123 = vshrl.u32 %v1122, 7
        %v1124 = vsub.s32 0, %v1123
        %v1125 = vrot.slane %v1084, %v1124
        %v1126 = vlaneseq
        %v1127 = vshrl.u32 %v1126, 7
        %v1128 = vsub.s32 1, %v1127
        %v1129 = vrot.slane %v1084, %v1128
        %v1130 = vlaneseq
        %v1131 = vshrl.u32 %v1130, 7
        %v1132 = vsub.s32 2, %v1131
        %v1133 = vrot.slane %v1084, %v1132
        %v1134 = vlaneseq
        %v1135 = vshrl.u32 %v1134, 7
        %v1136 = vsub.s32 3, %v1135
        %v1137 = vrot.slane %v1084, %v1136
        %v1138 = vlaneseq
        %v1139 = vshrl.u32 %v1138, 7
        %v1140 = vsub.s32 4, %v1139
        %v1141 = vrot.slane %v1084, %v1140
        %v1142 = vlaneseq
        %v1143 = vshrl.u32 %v1142, 7
        %v1144 = vsub.s32 5, %v1143
        %v1145 = vrot.slane %v1084, %v1144
        %v1152 = vsel %vm1089, %v1094, %v1125
        %v1153 = vsel %vm1089, %v1098, %v1129
        %v1154 = vsel %vm1089, %v1102, %v1133
        %v1155 = vsel %vm1089, %v1106, %v1137
        %v1156 = vsel %vm1089, %v1110, %v1141
        %v1157 = vsel %vm1089, %v1114, %v1145
        %v1158 = vadd.f32 %v706, %v1074
        %v1159 = vadd.f32 %v707, %v1075
        %v1160 = vadd.f32 %v708, %v1076
        %v1161 = vadd.f32 %v709, %v1077
        %v1162 = vadd.f32 %v710, %v1078
        %v1163 = vadd.f32 %v711, %v1079
        %v1164 = vadd.f32 %v1158, %v1152
        %v1165 = vadd.f32 %v1159, %v1153
        %v1166 = vadd.f32 %v1160, %v1154
        %v1167 = vadd.f32 %v1161, %v1155
        %v1168 = vadd.f32 %v1162, %v1156
        %v1169 = vadd.f32 %v1163, %v1157
        %v1170 = vadd.f32 %v1164, %v1165
        %v1171 = vadd.f32 %v1170, %v1166
        %v1172 = vadd.f32 %v1171, %v1167
        %v1173 = vadd.f32 %v1172, %v1168
        %v1174 = vadd.f32 %v1173, %v1169
        %1175 = vadd.xlane.f32.xlu0 %v1174
        %v1176 = vpop.xlane.xlu0 %1175
        %v1177 = vrcp.pop 768.0
        %v1178 = vmul.f32 %v1176, %v1177
        %v1179 = vsub.f32 %v1164, %v1178
        %v1180 = vsub.f32 %v1165, %v1178
        %v1181 = vsub.f32 %v1166, %v1178
        %v1182 = vsub.f32 %v1167, %v1178
        %v1183 = vsub.f32 %v1168, %v1178
        %v1184 = vsub.f32 %v1169, %v1178
        %v1185 = vmul.f32 %v1179, %v1179
        %v1186 = vmul.f32 %v1180, %v1180
        %v1187 = vmul.f32 %v1181, %v1181
        %v1188 = vmul.f32 %v1182, %v1182
        %v1189 = vmul.f32 %v1183, %v1183
        %v1190 = vmul.f32 %v1184, %v1184
        %v1191 = vadd.f32 %v1185, %v1186
        %v1192 = vadd.f32 %v1191, %v1187
        %v1193 = vadd.f32 %v1192, %v1188
        %v1194 = vadd.f32 %v1193, %v1189
        %v1195 = vadd.f32 %v1194, %v1190
        %1196 = vadd.xlane.f32.xlu0 %v1195
        %v1197 = vpop.xlane.xlu0 %1196
        %v1198 = vmul.f32 %v1197, %v1177
        %v1199 = vadd.f32 %v1198, 1e-05
        %v1200 = vrsqrt.pop %v1199
        %v1201 = vmul.f32 %v1179, %v1200
        %v1202 = vmul.f32 %v1180, %v1200
        %v1203 = vmul.f32 %v1181, %v1200
        %v1204 = vmul.f32 %v1182, %v1200
        %v1205 = vmul.f32 %v1183, %v1200
        %v1206 = vmul.f32 %v1184, %v1200
        %v1207 = vld [vmem:[#allocation11] sm:$0x3f]
        %v1209 = vlaneseq
        %v1210 = vshrl.u32 %v1209, 7
        %v1211 = vsub.s32 0, %v1210
        %v1212 = vrot.slane %v1207, %v1211
        %v1213 = vlaneseq
        %v1214 = vshrl.u32 %v1213, 7
        %v1215 = vsub.s32 1, %v1214
        %v1216 = vrot.slane %v1207, %v1215
        %v1217 = vlaneseq
        %v1218 = vshrl.u32 %v1217, 7
        %v1219 = vsub.s32 2, %v1218
        %v1220 = vrot.slane %v1207, %v1219
        %v1221 = vlaneseq
        %v1222 = vshrl.u32 %v1221, 7
        %v1223 = vsub.s32 3, %v1222
        %v1224 = vrot.slane %v1207, %v1223
        %v1225 = vlaneseq
        %v1226 = vshrl.u32 %v1225, 7
        %v1227 = vsub.s32 4, %v1226
        %v1228 = vrot.slane %v1207, %v1227
        %v1229 = vlaneseq
        %v1230 = vshrl.u32 %v1229, 7
        %v1231 = vsub.s32 5, %v1230
        %v1232 = vrot.slane %v1207, %v1231
        %v1239 = vmul.f32 %v1201, %v1212
        %v1240 = vmul.f32 %v1202, %v1216
        %v1241 = vmul.f32 %v1203, %v1220
        %v1242 = vmul.f32 %v1204, %v1224
        %v1243 = vmul.f32 %v1205, %v1228
        %v1244 = vmul.f32 %v1206, %v1232
        %v1245 = vld [vmem:[#allocation12] sm:$0x3f]
        %v1247 = vlaneseq
        %v1248 = vshrl.u32 %v1247, 7
        %v1249 = vsub.s32 0, %v1248
        %v1250 = vrot.slane %v1245, %v1249
        %v1251 = vlaneseq
        %v1252 = vshrl.u32 %v1251, 7
        %v1253 = vsub.s32 1, %v1252
        %v1254 = vrot.slane %v1245, %v1253
        %v1255 = vlaneseq
        %v1256 = vshrl.u32 %v1255, 7
        %v1257 = vsub.s32 2, %v1256
        %v1258 = vrot.slane %v1245, %v1257
        %v1259 = vlaneseq
        %v1260 = vshrl.u32 %v1259, 7
        %v1261 = vsub.s32 3, %v1260
        %v1262 = vrot.slane %v1245, %v1261
        %v1263 = vlaneseq
        %v1264 = vshrl.u32 %v1263, 7
        %v1265 = vsub.s32 4, %v1264
        %v1266 = vrot.slane %v1245, %v1265
        %v1267 = vlaneseq
        %v1268 = vshrl.u32 %v1267, 7
        %v1269 = vsub.s32 5, %v1268
        %v1270 = vrot.slane %v1245, %v1269
        %v1277 = vadd.f32 %v1239, %v1250
        %v1278 = vadd.f32 %v1240, %v1254
        %v1279 = vadd.f32 %v1241, %v1258
        %v1280 = vadd.f32 %v1242, %v1262
        %v1281 = vadd.f32 %v1243, %v1266
        %v1282 = vadd.f32 %v1244, %v1270
        %1283 = vst [vmem:[%s274] sm:$0xff] %v1277
        %1284 = vst [vmem:[%s274 + $0x8] sm:$0xff] %v1278
        %1285 = vst [vmem:[%s274 + $0x10] sm:$0xff] %v1279
        %1286 = vst [vmem:[%s274 + $0x18] sm:$0xff] %v1280
        %1287 = vst [vmem:[%s274 + $0x20] sm:$0xff] %v1281
        %1288 = vst [vmem:[%s274 + $0x28] sm:$0xff] %v1282
        %s1289 = sand.u32 %s146, 1
        %s1290 = scalar_lea.sflag [#allocation8], %s1289
        %s1291 = sand.u32 %s146, 1
        %s1292 = smul.addr %s1291, 48
        %s1293 = scalar_lea.vmem [#allocation14], %s1292
        // Predicated region
        $region65: #{tpu_custom_call.1} parent=39 // pred_check
          %p1294 = pneg %p156
        $region66: #{tpu_custom_call.1} parent=39 // pred_check_branch
          %1296 = sbr.rel (%p1294) target = $region68
        $region67: #{tpu_custom_call.1} parent=39 // pred_region
          %s1298 = ssub.s32 768, 768
          %1299 = vsyncadd %s1290, %s1298
          %s1300 = smul.addr %s28, 6
          %s1301 = smul.addr %s1300, 128
          %s1302 = scalar_lea.hbm %s7, %s1301
          %s1304 = sshll.u32 %s1293, 4
          %s1305 = int_to_ptr.vmem [resolvable:$true] %s1304
          %1307 = dma.vmem_to_hbm [thread:$0]  %s1305, 768, %s1302, %s1290
        $region68: #{tpu_custom_call.1} parent=39 // pred_fallthru
          _
      $region40: #{tpu_custom_call.1} parent=5 // pred_fallthru
        _
      %p1308 = scmp.le.s32.totalorder 2, %s23
      // Predicated region
      $region69: #{tpu_custom_call.1} parent=5 // pred_check
        %p1309 = pneg %p1308
      $region70: #{tpu_custom_call.1} parent=5 // pred_check_branch
        %1311 = sbr.rel (%p1309) target = $region72
      $region71: #{tpu_custom_call.1} parent=5 // pred_region
        %s1312 = ssub.s32 %s23, 2
        // Predicated region
        $region73: #{tpu_custom_call.1} parent=71 // pred_check
          %p1313 = pneg %p162
        $region74: #{tpu_custom_call.1} parent=71 // pred_check_branch
          %1315 = sbr.rel (%p1313) target = $region76
        $region75: #{tpu_custom_call.1} parent=71 // pred_region
          %s1316 = sand.u32 %s147, 1
          %s1317 = scalar_lea.sflag [#allocation8], %s1316
          %s1318 = sand.u32 %s147, 1
          %s1319 = smul.addr %s1318, 48
          %s1320 = scalar_lea.vmem [#allocation14], %s1319
          %1321 = dma.done %s1317, 768
        $region76: #{tpu_custom_call.1} parent=71 // pred_fallthru
          _
      $region72: #{tpu_custom_call.1} parent=5 // pred_fallthru
        _
    $region6: #{tpu_custom_call.1} parent=1 // loop_footer
      %s27 = sadd.s32 1, %s23
    $region7: #{tpu_custom_call.1} parent=1 // loop_footer_branch
      %22 = sbr.rel target = $region3
    $region8: #{tpu_custom_call.1} parent=1 // loop_exit
      _
    %1322 = vsyncpa [#allocation7], 1
    %s1323 = scalar_lea.sflag [#allocation7], 1
    %1324 = vsyncpa %s1323, 1
    %1325 = vsyncpa [#allocation10], 1
    %1326 = vsyncpa [#allocation13], 1
    %1327 = vsyncpa [#allocation8], 1
    %s1328 = scalar_lea.sflag [#allocation8], 1
    %1329 = vsyncpa %s1328, 1
  %1330 = vsyncmov [#allocation3]
  %s1331 = vpop.sfrf %1330
  %p1332 = scmp.eq.s32.totalorder %s1331, 0
  %p1333 = pneg %p1332
  %1335 = shalt.err (%p1333)
  %s1336 = scalar_lea.sflag [#allocation3], 1
  %1337 = vsyncmov %s1336
  %s1338 = vpop.sfrf %1337
  %p1339 = scmp.eq.s32.totalorder %s1338, 0
  %p1340 = pneg %p1339
  %1342 = shalt.err (%p1340)
  %s1343 = scalar_lea.sflag [#allocation3], 2
  %1344 = vsyncmov %s1343
  %s1345 = vpop.sfrf %1344
  %p1346 = scmp.eq.s32.totalorder %s1345, 0
  %p1347 = pneg %p1346
  %1349 = shalt.err (%p1347)
  %s1350 = scalar_lea.sflag [#allocation3], 3
  %1351 = vsyncmov %s1350
  %s1352 = vpop.sfrf %1351
  %p1353 = scmp.eq.s32.totalorder %s1352, 0
  %p1354 = pneg %p1353
  %1356 = shalt.err (%p1354)
  %s1357 = scalar_lea.sflag [#allocation3], 4
  %1358 = vsyncmov %s1357
  %s1359 = vpop.sfrf %1358
  %p1360 = scmp.eq.s32.totalorder %s1359, 0
  %p1361 = pneg %p1360
  %1363 = shalt.err (%p1361)
  %s1364 = scalar_lea.sflag [#allocation3], 5
  %1365 = vsyncmov %s1364
  %s1366 = vpop.sfrf %1365
  %p1367 = scmp.eq.s32.totalorder %s1366, 0
  %p1368 = pneg %p1367
  %1370 = shalt.err (%p1368)
  %s1371 = scalar_lea.sflag [#allocation3], 6
  %1372 = vsyncmov %s1371
  %s1373 = vpop.sfrf %1372
  %p1374 = scmp.eq.s32.totalorder %s1373, 0
  %p1375 = pneg %p1374
  %1377 = shalt.err (%p1375)
  %s1378 = scalar_lea.sflag [#allocation3], 7
  %1379 = vsyncmov %s1378
  %s1380 = vpop.sfrf %1379
  %p1381 = scmp.eq.s32.totalorder %s1380, 0
  %p1382 = pneg %p1381
  %1384 = shalt.err (%p1382)
  %s1385 = scalar_lea.sflag [#allocation3], 8
  %1386 = vsyncmov %s1385
  %s1387 = vpop.sfrf %1386
  %p1388 = scmp.eq.s32.totalorder %s1387, 0
  %p1389 = pneg %p1388
  %1391 = shalt.err (%p1389)
  %s1392 = scalar_lea.sflag [#allocation3], 9
  %1393 = vsyncmov %s1392
  %s1394 = vpop.sfrf %1393
  %p1395 = scmp.eq.s32.totalorder %s1394, 0
  %p1396 = pneg %p1395
  %1398 = shalt.err (%p1396)
  %s1399 = scalar_lea.sflag [#allocation3], 10
  %1400 = vsyncmov %s1399
  %s1401 = vpop.sfrf %1400
  %p1402 = scmp.eq.s32.totalorder %s1401, 0
  %p1403 = pneg %p1402
  %1405 = shalt.err (%p1403)
  %s1406 = scalar_lea.sflag [#allocation3], 11
  %1407 = vsyncmov %s1406
  %s1408 = vpop.sfrf %1407
  %p1409 = scmp.eq.s32.totalorder %s1408, 0
  %p1410 = pneg %p1409
  %1412 = shalt.err (%p1410)
  %s1413 = scalar_lea.sflag [#allocation3], 12
  %1414 = vsyncmov %s1413
  %s1415 = vpop.sfrf %1414
  %p1416 = scmp.eq.s32.totalorder %s1415, 0
  %p1417 = pneg %p1416
  %1419 = shalt.err (%p1417)
  %s1420 = scalar_lea.sflag [#allocation3], 13
  %1421 = vsyncmov %s1420
  %s1422 = vpop.sfrf %1421
  %p1423 = scmp.eq.s32.totalorder %s1422, 0
  %p1424 = pneg %p1423
  %1426 = shalt.err (%p1424)
  %s1427 = scalar_lea.sflag [#allocation3], 14
  %1428 = vsyncmov %s1427
  %s1429 = vpop.sfrf %1428
  %p1430 = scmp.eq.s32.totalorder %s1429, 0
  %p1431 = pneg %p1430
  %1433 = shalt.err (%p1431)
  %s1434 = scalar_lea.sflag [#allocation3], 15
  %1435 = vsyncmov %s1434
  %s1436 = vpop.sfrf %1435
  %p1437 = scmp.eq.s32.totalorder %s1436, 0
  %p1438 = pneg %p1437
  %1440 = shalt.err (%p1438)
  %s1441 = scalar_lea.sflag [#allocation3], 16
  %1442 = vsyncmov %s1441
  %s1443 = vpop.sfrf %1442
  %p1444 = scmp.eq.s32.totalorder %s1443, 0
  %p1445 = pneg %p1444
  %1447 = shalt.err (%p1445)
  %s1448 = scalar_lea.sflag [#allocation3], 17
  %1449 = vsyncmov %s1448
  %s1450 = vpop.sfrf %1449
  %p1451 = scmp.eq.s32.totalorder %s1450, 0
  %p1452 = pneg %p1451
  %1454 = shalt.err (%p1452)
  %s1455 = scalar_lea.sflag [#allocation3], 18
  %1456 = vsyncmov %s1455
  %s1457 = vpop.sfrf %1456
  %p1458 = scmp.eq.s32.totalorder %s1457, 0
  %p1459 = pneg %p1458
  %1461 = shalt.err (%p1459)
  %s1462 = scalar_lea.sflag [#allocation3], 19
  %1463 = vsyncmov %s1462
  %s1464 = vpop.sfrf %1463
  %p1465 = scmp.eq.s32.totalorder %s1464, 0
  %p1466 = pneg %p1465
  %1468 = shalt.err (%p1466)
  %s1469 = scalar_lea.sflag [#allocation3], 20
  %1470 = vsyncmov %s1469
  %s1471 = vpop.sfrf %1470
  %p1472 = scmp.eq.s32.totalorder %s1471, 0
  %p1473 = pneg %p1472
  %1475 = shalt.err (%p1473)
  %s1476 = scalar_lea.sflag [#allocation3], 21
  %1477 = vsyncmov %s1476
  %s1478 = vpop.sfrf %1477
  %p1479 = scmp.eq.s32.totalorder %s1478, 0
  %p1480 = pneg %p1479
  %1482 = shalt.err (%p1480)
  %s1483 = scalar_lea.sflag [#allocation3], 22
  %1484 = vsyncmov %s1483
  %s1485 = vpop.sfrf %1484
  %p1486 = scmp.eq.s32.totalorder %s1485, 0
  %p1487 = pneg %p1486
  %1489 = shalt.err (%p1487)
  %s1490 = scalar_lea.sflag [#allocation3], 23
  %1491 = vsyncmov %s1490
  %s1492 = vpop.sfrf %1491
  %p1493 = scmp.eq.s32.totalorder %s1492, 0
  %p1494 = pneg %p1493
  %1496 = shalt.err (%p1494)
  %s1497 = scalar_lea.sflag [#allocation3], 24
  %1498 = vsyncmov %s1497
  %s1499 = vpop.sfrf %1498
  %p1500 = scmp.eq.s32.totalorder %s1499, 0
  %p1501 = pneg %p1500
  %1503 = shalt.err (%p1501)
  %s1504 = scalar_lea.sflag [#allocation3], 25
  %1505 = vsyncmov %s1504
  %s1506 = vpop.sfrf %1505
  %p1507 = scmp.eq.s32.totalorder %s1506, 0
  %p1508 = pneg %p1507
  %1510 = shalt.err (%p1508)
  %s1511 = scalar_lea.sflag [#allocation3], 26
  %1512 = vsyncmov %s1511
  %s1513 = vpop.sfrf %1512
  %p1514 = scmp.eq.s32.totalorder %s1513, 0
  %p1515 = pneg %p1514
  %1517 = shalt.err (%p1515)
  %s1518 = scalar_lea.sflag [#allocation3], 27
  %1519 = vsyncmov %s1518
  %s1520 = vpop.sfrf %1519
  %p1521 = scmp.eq.s32.totalorder %s1520, 0
  %p1522 = pneg %p1521
  %1524 = shalt.err (%p1522)
  %s1525 = scalar_lea.sflag [#allocation3], 28
  %1526 = vsyncmov %s1525
  %s1527 = vpop.sfrf %1526
  %p1528 = scmp.eq.s32.totalorder %s1527, 0
  %p1529 = pneg %p1528
  %1531 = shalt.err (%p1529)
  %s1532 = scalar_lea.sflag [#allocation3], 29
  %1533 = vsyncmov %s1532
  %s1534 = vpop.sfrf %1533
  %p1535 = scmp.eq.s32.totalorder %s1534, 0
  %p1536 = pneg %p1535
  %1538 = shalt.err (%p1536)
  %s1539 = scalar_lea.sflag [#allocation3], 30
  %1540 = vsyncmov %s1539
  %s1541 = vpop.sfrf %1540
  %p1542 = scmp.eq.s32.totalorder %s1541, 0
  %p1543 = pneg %p1542
  %1545 = shalt.err (%p1543)
  %s1546 = scalar_lea.sflag [#allocation3], 31
  %1547 = vsyncmov %s1546
  %s1548 = vpop.sfrf %1547
  %p1549 = scmp.eq.s32.totalorder %s1548, 0
  %p1550 = pneg %p1549
  %1552 = shalt.err (%p1550)

</llo_original>
